<compile_context>
chip_gen: v7x
topology: tpu7x:2x2x1
jax: 0.10.0
libtpu: 0.0.40
codegen_flags: <defaults>
</compile_context>

<pallas_src>
import jax
import jax.numpy as jnp
from jax.experimental import pallas as pl
from jax.experimental.pallas import tpu as pltpu


# ---------------------------------------------------------------------------
# Wrapper-side weight packing
# ---------------------------------------------------------------------------
def _toeplitz_conv_weights(w_oihw, W):
    """(Cout, Cin, 3, 3) OIHW conv weights -> 3 block-Toeplitz matrices.

    T[dy] has shape ((W+2)*Cin, W*Cout) with
      T[dy][col*Cin + ci, x*Cout + co] = w[co, ci, dy, col - x]  (0 <= col-x <= 2)
    so that   out_row[y] = sum_dy  xpad_row[y+dy] @ T[dy]
    where xpad_row is the zero-padded input row flattened to (W+2)*Cin lanes.
    """
    Cout, Cin, KH, KW = w_oihw.shape
    assert (KH, KW) == (3, 3)
    wk = jnp.transpose(w_oihw, (2, 3, 1, 0)).astype(jnp.float32)  # (3,3,Cin,Cout)
    mats = []
    for dy in range(3):
        t = jnp.zeros(((W + 2) * Cin, W * Cout), jnp.float32)
        for dx in range(3):
            sel = jnp.eye(W + 2, W, k=-dx, dtype=jnp.float32)  # col == x_out + dx
            t = t + jnp.kron(sel, wk[dy, dx])
        mats.append(t)
    return jnp.stack(mats)                                      # (3,(W+2)*Cin,W*Cout)


def _pool_select_matrices(W, Cout):
    """Exact 0/1 matrices picking even/odd columns of the 2x horizontal pool."""
    Wo = W // 2
    eye_c = jnp.eye(Cout, dtype=jnp.float32)
    mats = []
    for s in range(2):
        sel = jnp.zeros((W, Wo), jnp.float32).at[
            2 * jnp.arange(Wo) + s, jnp.arange(Wo)].set(1.0)
        mats.append(jnp.kron(sel, eye_c))
    return jnp.stack(mats)                                      # (2, W*Cout, Wo*Cout)


# ---------------------------------------------------------------------------
# Fused kernel (one batch element per grid step)
# ---------------------------------------------------------------------------
def _make_fused_kernel(H, W, Cin, Cout, pool):
    Ho, Wo = H // 2, W // 2

    def kernel(x_ref, t1_ref, b1_ref, t2_ref, b2_ref, s_ref, o_ref,
               pad1_ref, pad2_ref):
        # x_ref : (1, H, W*Cin)                input image, channels packed in lanes
        # t1_ref: (3, (W+2)*Cin,  W*Cout)      block-Toeplitz conv1 weights
        # b1_ref: (1, W*Cout)                  bias tiled per output column
        # t2_ref: (3, (W+2)*Cout, W*Cout)      block-Toeplitz conv2 weights
        # b2_ref: (1, W*Cout)
        # s_ref : (2, W*Cout, Wo*Cout)         0/1 horizontal-pool selection
        # o_ref : (1, Ho, Wo*Cout)  [pool]  or  (1, H, W*Cout)  [no pool]
        # pad1_ref / pad2_ref: VMEM scratch holding the zero-padded activations

        # ---- conv1: pad in VMEM, then 3 row-shifted matmuls (K = (W+2)*Cin) ----
        pad1_ref[...] = jnp.zeros_like(pad1_ref)
        pad1_ref[1:H + 1, Cin:Cin + W * Cin] = x_ref[0]
        acc = jnp.zeros((H, W * Cout), jnp.float32)
        for dy in range(3):                                    # static, unrolled
            acc = acc + jnp.dot(pad1_ref[dy:dy + H, :], t1_ref[dy],
                                preferred_element_type=jnp.float32)
        y1 = jnp.maximum(acc + b1_ref[0], 0.0)                 # (H, W*Cout) in VMEM

        # ---- conv2: same structure with Cin -> Cout ----
        pad2_ref[...] = jnp.zeros_like(pad2_ref)
        pad2_ref[1:H + 1, Cout:Cout + W * Cout] = y1
        acc2 = jnp.zeros((H, W * Cout), jnp.float32)
        for dy in range(3):
            acc2 = acc2 + jnp.dot(pad2_ref[dy:dy + H, :], t2_ref[dy],
                                  preferred_element_type=jnp.float32)
        y2 = jnp.maximum(acc2 + b2_ref[0], 0.0)                # (H, W*Cout)

        if pool:
            # vertical 2-max: reshape splits rows only (lane layout untouched)
            y2r = y2.reshape(Ho, 2, W * Cout)
            v = jnp.maximum(y2r[:, 0, :], y2r[:, 1, :])        # (Ho, W*Cout)
            # horizontal 2-max: exact 0/1 selection matmuls, then elementwise max
            even = jnp.dot(v, s_ref[0], preferred_element_type=jnp.float32)
            odd = jnp.dot(v, s_ref[1], preferred_element_type=jnp.float32)
            o_ref[0] = jnp.maximum(even, odd).astype(o_ref.dtype)   # (Ho, Wo*Cout)
        else:
            o_ref[0] = y2.astype(o_ref.dtype)

    return kernel


# ---------------------------------------------------------------------------
# ConvBlock forward (batch_norm=False). NHWC core + NCHW wrapper.
# ---------------------------------------------------------------------------
def conv_block_forward_nhwc(x_nhwc, params, pool=True):
    """Fused ConvBlock on NHWC input; returns NHWC output. Use this to chain
    blocks without per-block layout transposes."""
    w1, b1, w2, b2 = params
    N, H, W, Cin = x_nhwc.shape
    Cout = w1.shape[0]
    if pool:
        # TODO(synk): odd H/W (MaxPool2d floor semantics) not handled.
        assert H % 2 == 0 and W % 2 == 0
    Ho, Wo = H // 2, W // 2

    x2d = x_nhwc.reshape(N, H, W * Cin).astype(jnp.float32)
    t1 = _toeplitz_conv_weights(w1, W)                 # (3, (W+2)*Cin,  W*Cout)
    t2 = _toeplitz_conv_weights(w2, W)                 # (3, (W+2)*Cout, W*Cout)
    b1r = jnp.tile(b1.astype(jnp.float32), W).reshape(1, W * Cout)
    b2r = jnp.tile(b2.astype(jnp.float32), W).reshape(1, W * Cout)
    s = _pool_select_matrices(W, Cout)                 # (2, W*Cout, Wo*Cout)

    if pool:
        out_shape = jax.ShapeDtypeStruct((N, Ho, Wo * Cout), jnp.float32)
        out_spec = pl.BlockSpec((1, Ho, Wo * Cout), lambda n: (n, 0, 0))
    else:
        out_shape = jax.ShapeDtypeStruct((N, H, W * Cout), jnp.float32)
        out_spec = pl.BlockSpec((1, H, W * Cout), lambda n: (n, 0, 0))

    kernel = _make_fused_kernel(H, W, Cin, Cout, pool)
    out = pl.pallas_call(
        kernel,
        out_shape=out_shape,
        grid_spec=pltpu.PrefetchScalarGridSpec(
            num_scalar_prefetch=0,
            grid=(N,),
            in_specs=[
                pl.BlockSpec((1, H, W * Cin), lambda n: (n, 0, 0)),
                pl.BlockSpec((3, (W + 2) * Cin, W * Cout), lambda n: (0, 0, 0)),
                pl.BlockSpec((1, W * Cout), lambda n: (0, 0)),
                pl.BlockSpec((3, (W + 2) * Cout, W * Cout), lambda n: (0, 0, 0)),
                pl.BlockSpec((1, W * Cout), lambda n: (0, 0)),
                pl.BlockSpec((2, W * Cout, Wo * Cout), lambda n: (0, 0, 0)),
            ],
            out_specs=out_spec,
            scratch_shapes=[
                pltpu.VMEM((H + 2, (W + 2) * Cin), jnp.float32),   # padded input
                pltpu.VMEM((H + 2, (W + 2) * Cout), jnp.float32),  # padded conv1 act
            ],
        ),
        compiler_params=pltpu.CompilerParams(
            dimension_semantics=("parallel",),
            vmem_limit_bytes=32 * 1024 * 1024,
        ),
    )(x2d, t1, b1r, t2, b2r, s)

    if pool:
        return out.reshape(N, Ho, Wo, Cout)
    return out.reshape(N, H, W, Cout)


def conv_block_forward(x_nchw, params, pool=True):
    # TODO(synk): batch_norm=True branch (nn.BatchNorm2d) not implemented; module default is False.
    x = jnp.transpose(x_nchw, (0, 2, 3, 1))            # NCHW -> NHWC (once)
    y = conv_block_forward_nhwc(x, params, pool=pool)
    return jnp.transpose(y, (0, 3, 1, 2))              # NHWC -> NCHW


def init_conv_block_params(key, inchannels, outchannels):
    k1, k2, k3, k4 = jax.random.split(key, 4)
    s1 = 1.0 / jnp.sqrt(jnp.float32(inchannels * 9))
    s2 = 1.0 / jnp.sqrt(jnp.float32(outchannels * 9))
    w1 = jax.random.normal(k1, (outchannels, inchannels, 3, 3), jnp.float32) * s1
    b1 = jax.random.normal(k2, (outchannels,), jnp.float32) * 0.01
    w2 = jax.random.normal(k3, (outchannels, outchannels, 3, 3), jnp.float32) * s2
    b2 = jax.random.normal(k4, (outchannels,), jnp.float32) * 0.01
    return w1, b1, w2, b2


# ---------------------------------------------------------------------------
# Pure-JAX reference (sanity check)
# ---------------------------------------------------------------------------
def conv_block_reference(x_nchw, params, pool=True):
    w1, b1, w2, b2 = params

    def conv(x, w, b):
        y = jax.lax.conv_general_dilated(
            x, w, window_strides=(1, 1), padding=((1, 1), (1, 1)),
            dimension_numbers=("NCHW", "OIHW", "NCHW"))
        return jnp.maximum(y + b[None, :, None, None], 0.0)

    x = conv(x_nchw, w1, b1)
    x = conv(x, w2, b2)
    if pool:
        x = jax.lax.reduce_window(
            x, -jnp.inf, jax.lax.max,
            window_dimensions=(1, 1, 2, 2), window_strides=(1, 1, 2, 2),
            padding="VALID")
    return x


if __name__ == "__main__":
    key = jax.random.PRNGKey(0)
    kx, kp = jax.random.split(key)

    N, Cin, H, W = 2, 4, 16, 16
    Cout = 8
    x = jax.random.normal(kx, (N, Cin, H, W), jnp.float32)
    params = init_conv_block_params(kp, Cin, Cout)

    out = jax.block_until_ready(conv_block_forward(x, params, pool=True))
    ref = jax.block_until_ready(conv_block_reference(x, params, pool=True))

    assert out.shape == (N, Cout, H // 2, W // 2), out.shape
    max_err = float(jnp.max(jnp.abs(out - ref)))
    assert jnp.allclose(out, ref, rtol=1e-4, atol=1e-4), max_err

    print("KERNEL_OK")
</pallas_src>

<mosaic_0001>
module attributes {stable_mosaic.version = 11 : i64} {
  func.func @kernel(%arg0: i32, %arg1: memref<1x16x64xf32, #tpu.memory_space<vmem>>, %arg2: memref<3x72x128xf32, #tpu.memory_space<vmem>>, %arg3: memref<1x128xf32, #tpu.memory_space<vmem>>, %arg4: memref<3x144x128xf32, #tpu.memory_space<vmem>>, %arg5: memref<1x128xf32, #tpu.memory_space<vmem>>, %arg6: memref<2x128x64xf32, #tpu.memory_space<vmem>>, %arg7: memref<1x8x64xf32, #tpu.memory_space<vmem>>, %arg8: memref<18x72xf32, #tpu.memory_space<vmem>>, %arg9: memref<18x144xf32, #tpu.memory_space<vmem>>) attributes {dimension_semantics = [#tpu.dimension_semantics<parallel>], iteration_bounds = array<i64: 2>, scalar_prefetch = 0 : i64, scratch_operands = 2 : i64, tpu.core_type = #tpu.core_type<tc>, window_params = [{transform_indices = @transform_0, window_bounds = array<i64: 1, 16, 64>}, {pipeline_mode = #tpu.pipeline_mode<synchronous>, transform_indices = @transform_1, window_bounds = array<i64: 3, 72, 128>}, {pipeline_mode = #tpu.pipeline_mode<synchronous>, transform_indices = @transform_2, window_bounds = array<i64: 1, 128>}, {pipeline_mode = #tpu.pipeline_mode<synchronous>, transform_indices = @transform_3, window_bounds = array<i64: 3, 144, 128>}, {pipeline_mode = #tpu.pipeline_mode<synchronous>, transform_indices = @transform_4, window_bounds = array<i64: 1, 128>}, {pipeline_mode = #tpu.pipeline_mode<synchronous>, transform_indices = @transform_5, window_bounds = array<i64: 2, 128, 64>}, {transform_indices = @transform_6, window_bounds = array<i64: 1, 8, 64>}]} {
    %cst = arith.constant 0.000000e+00 : f32
    %0 = vector.broadcast %cst : f32 to vector<18x72xf32>
    %c0 = arith.constant 0 : index
    %c0_0 = arith.constant 0 : index
    %1 = vector.load %arg8[%c0, %c0_0] : memref<18x72xf32, #tpu.memory_space<vmem>>, vector<18x72xf32>
    tpu.vector_store %arg8[%c0, %c0_0], %0 {strides = array<i32>} : memref<18x72xf32, #tpu.memory_space<vmem>>, vector<18x72xf32>,
    %c0_1 = arith.constant 0 : index
    %c0_2 = arith.constant 0 : index
    %c0_3 = arith.constant 0 : index
    %2 = vector.load %arg1[%c0_1, %c0_2, %c0_3] : memref<1x16x64xf32, #tpu.memory_space<vmem>>, vector<1x16x64xf32>
    %3 = vector.shape_cast %2 : vector<1x16x64xf32> to vector<16x64xf32>
    %c1 = arith.constant 1 : index
    %c4 = arith.constant 4 : index
    %4 = vector.load %arg8[%c1, %c4] : memref<18x72xf32, #tpu.memory_space<vmem>>, vector<16x64xf32>
    tpu.vector_store %arg8[%c1, %c4], %3 {strides = array<i32>} : memref<18x72xf32, #tpu.memory_space<vmem>>, vector<16x64xf32>,
    %cst_4 = arith.constant 0.000000e+00 : f32
    %5 = vector.broadcast %cst_4 : f32 to vector<16x128xf32>
    %c0_5 = arith.constant 0 : index
    %c0_6 = arith.constant 0 : index
    %6 = vector.load %arg8[%c0_5, %c0_6] : memref<18x72xf32, #tpu.memory_space<vmem>>, vector<16x72xf32>
    %c0_7 = arith.constant 0 : index
    %c0_8 = arith.constant 0 : index
    %c0_9 = arith.constant 0 : index
    %7 = vector.load %arg2[%c0_7, %c0_8, %c0_9] : memref<3x72x128xf32, #tpu.memory_space<vmem>>, vector<1x72x128xf32>
    %8 = vector.shape_cast %7 : vector<1x72x128xf32> to vector<72x128xf32>
    %cst_10 = arith.constant dense<0.000000e+00> : vector<16x128xf32>
    %9 = tpu.matmul %6, %8, %cst_10 {dimension_numbers = #tpu.dot_dimension_numbers<[1], [0], [0], [1], [0, 0, 1, 1], [], []>} : vector<16x72xf32>, vector<72x128xf32>, vector<16x128xf32> -> vector<16x128xf32>
    %10 = arith.addf %5, %9 : vector<16x128xf32>
    %c1_11 = arith.constant 1 : index
    %c0_12 = arith.constant 0 : index
    %11 = vector.load %arg8[%c1_11, %c0_12] : memref<18x72xf32, #tpu.memory_space<vmem>>, vector<16x72xf32>
    %c1_13 = arith.constant 1 : index
    %c0_14 = arith.constant 0 : index
    %c0_15 = arith.constant 0 : index
    %12 = vector.load %arg2[%c1_13, %c0_14, %c0_15] : memref<3x72x128xf32, #tpu.memory_space<vmem>>, vector<1x72x128xf32>
    %13 = vector.shape_cast %12 : vector<1x72x128xf32> to vector<72x128xf32>
    %cst_16 = arith.constant dense<0.000000e+00> : vector<16x128xf32>
    %14 = tpu.matmul %11, %13, %cst_16 {dimension_numbers = #tpu.dot_dimension_numbers<[1], [0], [0], [1], [0, 0, 1, 1], [], []>} : vector<16x72xf32>, vector<72x128xf32>, vector<16x128xf32> -> vector<16x128xf32>
    %15 = arith.addf %10, %14 : vector<16x128xf32>
    %c2 = arith.constant 2 : index
    %c0_17 = arith.constant 0 : index
    %16 = vector.load %arg8[%c2, %c0_17] : memref<18x72xf32, #tpu.memory_space<vmem>>, vector<16x72xf32>
    %c2_18 = arith.constant 2 : index
    %c0_19 = arith.constant 0 : index
    %c0_20 = arith.constant 0 : index
    %17 = vector.load %arg2[%c2_18, %c0_19, %c0_20] : memref<3x72x128xf32, #tpu.memory_space<vmem>>, vector<1x72x128xf32>
    %18 = vector.shape_cast %17 : vector<1x72x128xf32> to vector<72x128xf32>
    %cst_21 = arith.constant dense<0.000000e+00> : vector<16x128xf32>
    %19 = tpu.matmul %16, %18, %cst_21 {dimension_numbers = #tpu.dot_dimension_numbers<[1], [0], [0], [1], [0, 0, 1, 1], [], []>} : vector<16x72xf32>, vector<72x128xf32>, vector<16x128xf32> -> vector<16x128xf32>
    %20 = arith.addf %15, %19 : vector<16x128xf32>
    %c0_22 = arith.constant 0 : index
    %c0_23 = arith.constant 0 : index
    %21 = vector.load %arg3[%c0_22, %c0_23] : memref<1x128xf32, #tpu.memory_space<vmem>>, vector<1x128xf32>
    %22 = vector.shape_cast %21 : vector<1x128xf32> to vector<128xf32>
    %23 = vector.shape_cast %22 : vector<128xf32> to vector<1x128xf32>
    %24 = vector.broadcast %23 : vector<1x128xf32> to vector<16x128xf32>
    %25 = arith.addf %20, %24 : vector<16x128xf32>
    %cst_24 = arith.constant 0.000000e+00 : f32
    %26 = vector.broadcast %cst_24 : f32 to vector<16x128xf32>
    %27 = arith.maximumf %25, %26 : vector<16x128xf32>
    %cst_25 = arith.constant 0.000000e+00 : f32
    %28 = vector.broadcast %cst_25 : f32 to vector<18x144xf32>
    %c0_26 = arith.constant 0 : index
    %c0_27 = arith.constant 0 : index
    %29 = vector.load %arg9[%c0_26, %c0_27] : memref<18x144xf32, #tpu.memory_space<vmem>>, vector<18x144xf32>
    tpu.vector_store %arg9[%c0_26, %c0_27], %28 {strides = array<i32>} : memref<18x144xf32, #tpu.memory_space<vmem>>, vector<18x144xf32>,
    %c1_28 = arith.constant 1 : index
    %c8 = arith.constant 8 : index
    %30 = vector.load %arg9[%c1_28, %c8] : memref<18x144xf32, #tpu.memory_space<vmem>>, vector<16x128xf32>
    tpu.vector_store %arg9[%c1_28, %c8], %27 {strides = array<i32>} : memref<18x144xf32, #tpu.memory_space<vmem>>, vector<16x128xf32>,
    %cst_29 = arith.constant 0.000000e+00 : f32
    %31 = vector.broadcast %cst_29 : f32 to vector<16x128xf32>
    %c0_30 = arith.constant 0 : index
    %c0_31 = arith.constant 0 : index
    %32 = vector.load %arg9[%c0_30, %c0_31] : memref<18x144xf32, #tpu.memory_space<vmem>>, vector<16x144xf32>
    %c0_32 = arith.constant 0 : index
    %c0_33 = arith.constant 0 : index
    %c0_34 = arith.constant 0 : index
    %33 = vector.load %arg4[%c0_32, %c0_33, %c0_34] : memref<3x144x128xf32, #tpu.memory_space<vmem>>, vector<1x144x128xf32>
    %34 = vector.shape_cast %33 : vector<1x144x128xf32> to vector<144x128xf32>
    %cst_35 = arith.constant dense<0.000000e+00> : vector<16x128xf32>
    %35 = tpu.matmul %32, %34, %cst_35 {dimension_numbers = #tpu.dot_dimension_numbers<[1], [0], [0], [1], [0, 0, 1, 1], [], []>} : vector<16x144xf32>, vector<144x128xf32>, vector<16x128xf32> -> vector<16x128xf32>
    %36 = arith.addf %31, %35 : vector<16x128xf32>
    %c1_36 = arith.constant 1 : index
    %c0_37 = arith.constant 0 : index
    %37 = vector.load %arg9[%c1_36, %c0_37] : memref<18x144xf32, #tpu.memory_space<vmem>>, vector<16x144xf32>
    %c1_38 = arith.constant 1 : index
    %c0_39 = arith.constant 0 : index
    %c0_40 = arith.constant 0 : index
    %38 = vector.load %arg4[%c1_38, %c0_39, %c0_40] : memref<3x144x128xf32, #tpu.memory_space<vmem>>, vector<1x144x128xf32>
    %39 = vector.shape_cast %38 : vector<1x144x128xf32> to vector<144x128xf32>
    %cst_41 = arith.constant dense<0.000000e+00> : vector<16x128xf32>
    %40 = tpu.matmul %37, %39, %cst_41 {dimension_numbers = #tpu.dot_dimension_numbers<[1], [0], [0], [1], [0, 0, 1, 1], [], []>} : vector<16x144xf32>, vector<144x128xf32>, vector<16x128xf32> -> vector<16x128xf32>
    %41 = arith.addf %36, %40 : vector<16x128xf32>
    %c2_42 = arith.constant 2 : index
    %c0_43 = arith.constant 0 : index
    %42 = vector.load %arg9[%c2_42, %c0_43] : memref<18x144xf32, #tpu.memory_space<vmem>>, vector<16x144xf32>
    %c2_44 = arith.constant 2 : index
    %c0_45 = arith.constant 0 : index
    %c0_46 = arith.constant 0 : index
    %43 = vector.load %arg4[%c2_44, %c0_45, %c0_46] : memref<3x144x128xf32, #tpu.memory_space<vmem>>, vector<1x144x128xf32>
    %44 = vector.shape_cast %43 : vector<1x144x128xf32> to vector<144x128xf32>
    %cst_47 = arith.constant dense<0.000000e+00> : vector<16x128xf32>
    %45 = tpu.matmul %42, %44, %cst_47 {dimension_numbers = #tpu.dot_dimension_numbers<[1], [0], [0], [1], [0, 0, 1, 1], [], []>} : vector<16x144xf32>, vector<144x128xf32>, vector<16x128xf32> -> vector<16x128xf32>
    %46 = arith.addf %41, %45 : vector<16x128xf32>
    %c0_48 = arith.constant 0 : index
    %c0_49 = arith.constant 0 : index
    %47 = vector.load %arg5[%c0_48, %c0_49] : memref<1x128xf32, #tpu.memory_space<vmem>>, vector<1x128xf32>
    %48 = vector.shape_cast %47 : vector<1x128xf32> to vector<128xf32>
    %49 = vector.shape_cast %48 : vector<128xf32> to vector<1x128xf32>
    %50 = vector.broadcast %49 : vector<1x128xf32> to vector<16x128xf32>
    %51 = arith.addf %46, %50 : vector<16x128xf32>
    %cst_50 = arith.constant 0.000000e+00 : f32
    %52 = vector.broadcast %cst_50 : f32 to vector<16x128xf32>
    %53 = arith.maximumf %51, %52 : vector<16x128xf32>
    %54 = vector.shape_cast %53 : vector<16x128xf32> to vector<8x2x128xf32>
    %55 = vector.extract_strided_slice %54 {offsets = [0, 0, 0], sizes = [8, 1, 128], strides = [1, 1, 1]} : vector<8x2x128xf32> to vector<8x1x128xf32>
    %56 = vector.shape_cast %55 : vector<8x1x128xf32> to vector<8x128xf32>
    %57 = vector.extract_strided_slice %54 {offsets = [0, 1, 0], sizes = [8, 1, 128], strides = [1, 1, 1]} : vector<8x2x128xf32> to vector<8x1x128xf32>
    %58 = vector.shape_cast %57 : vector<8x1x128xf32> to vector<8x128xf32>
    %59 = arith.maximumf %56, %58 : vector<8x128xf32>
    %c0_51 = arith.constant 0 : index
    %c0_52 = arith.constant 0 : index
    %c0_53 = arith.constant 0 : index
    %60 = vector.load %arg6[%c0_51, %c0_52, %c0_53] : memref<2x128x64xf32, #tpu.memory_space<vmem>>, vector<1x128x64xf32>
    %61 = vector.shape_cast %60 : vector<1x128x64xf32> to vector<128x64xf32>
    %cst_54 = arith.constant dense<0.000000e+00> : vector<8x64xf32>
    %62 = tpu.matmul %59, %61, %cst_54 {dimension_numbers = #tpu.dot_dimension_numbers<[1], [0], [0], [1], [0, 0, 1, 1], [], []>} : vector<8x128xf32>, vector<128x64xf32>, vector<8x64xf32> -> vector<8x64xf32>
    %c1_55 = arith.constant 1 : index
    %c0_56 = arith.constant 0 : index
    %c0_57 = arith.constant 0 : index
    %63 = vector.load %arg6[%c1_55, %c0_56, %c0_57] : memref<2x128x64xf32, #tpu.memory_space<vmem>>, vector<1x128x64xf32>
    %64 = vector.shape_cast %63 : vector<1x128x64xf32> to vector<128x64xf32>
    %cst_58 = arith.constant dense<0.000000e+00> : vector<8x64xf32>
    %65 = tpu.matmul %59, %64, %cst_58 {dimension_numbers = #tpu.dot_dimension_numbers<[1], [0], [0], [1], [0, 0, 1, 1], [], []>} : vector<8x128xf32>, vector<128x64xf32>, vector<8x64xf32> -> vector<8x64xf32>
    %66 = arith.maximumf %62, %65 : vector<8x64xf32>
    %c0_59 = arith.constant 0 : index
    %c0_60 = arith.constant 0 : index
    %c0_61 = arith.constant 0 : index
    %67 = vector.load %arg7[%c0_59, %c0_60, %c0_61] : memref<1x8x64xf32, #tpu.memory_space<vmem>>, vector<1x8x64xf32>
    %68 = vector.shape_cast %67 : vector<1x8x64xf32> to vector<8x64xf32>
    %69 = vector.shape_cast %66 : vector<8x64xf32> to vector<1x8x64xf32>
    tpu.vector_store %arg7[%c0_59, %c0_60, %c0_61], %69 {strides = array<i32>} : memref<1x8x64xf32, #tpu.memory_space<vmem>>, vector<1x8x64xf32>,
    return
  }
  func.func @transform_0(%arg0: i32) -> (i32, i32, i32) {
    %c0_i32 = arith.constant 0 : i32
    %c0_i32_0 = arith.constant 0 : i32
    %c0_i32_1 = arith.constant 0 : i32
    return %arg0, %c0_i32, %c0_i32_0 : i32, i32, i32
  }
  func.func @transform_1(%arg0: i32) -> (i32, i32, i32) {
    %c0_i32 = arith.constant 0 : i32
    %c0_i32_0 = arith.constant 0 : i32
    %c0_i32_1 = arith.constant 0 : i32
    %c0_i32_2 = arith.constant 0 : i32
    return %c0_i32, %c0_i32_0, %c0_i32_1 : i32, i32, i32
  }
  func.func @transform_2(%arg0: i32) -> (i32, i32) {
    %c0_i32 = arith.constant 0 : i32
    %c0_i32_0 = arith.constant 0 : i32
    %c0_i32_1 = arith.constant 0 : i32
    return %c0_i32, %c0_i32_0 : i32, i32
  }
  func.func @transform_3(%arg0: i32) -> (i32, i32, i32) {
    %c0_i32 = arith.constant 0 : i32
    %c0_i32_0 = arith.constant 0 : i32
    %c0_i32_1 = arith.constant 0 : i32
    %c0_i32_2 = arith.constant 0 : i32
    return %c0_i32, %c0_i32_0, %c0_i32_1 : i32, i32, i32
  }
  func.func @transform_4(%arg0: i32) -> (i32, i32) {
    %c0_i32 = arith.constant 0 : i32
    %c0_i32_0 = arith.constant 0 : i32
    %c0_i32_1 = arith.constant 0 : i32
    return %c0_i32, %c0_i32_0 : i32, i32
  }
  func.func @transform_5(%arg0: i32) -> (i32, i32, i32) {
    %c0_i32 = arith.constant 0 : i32
    %c0_i32_0 = arith.constant 0 : i32
    %c0_i32_1 = arith.constant 0 : i32
    %c0_i32_2 = arith.constant 0 : i32
    return %c0_i32, %c0_i32_0, %c0_i32_1 : i32, i32, i32
  }
  func.func @transform_6(%arg0: i32) -> (i32, i32, i32) {
    %c0_i32 = arith.constant 0 : i32
    %c0_i32_0 = arith.constant 0 : i32
    %c0_i32_1 = arith.constant 0 : i32
    return %arg0, %c0_i32, %c0_i32_0 : i32, i32, i32
  }
}

</mosaic_0001>

<llo_original>
// kernel: tpu_custom_call.1
$region0: #{tpu_custom_call.1}
  #allocation0 [shape = 'u32[]', space=smem, size = 0x4, offset = 0x4, fixed_abs, tag = 'smem constant byte address 0x4 - core index']
  #allocation1 [shape = 'u32[144,128]{1,0:T(1,128)}', space=vmem, size = 0x12000, scoped, tag = 'internal scratch']
  #allocation2 [shape = 'f32[18,72]{1,0:T(8,128)}', space=vmem, size = 0x3000, scoped, tag = 'scratch operand']
  #allocation3 [shape = 'f32[18,144]{1,0:T(8,128)}', space=vmem, size = 0x6000, scoped, tag = 'scratch operand']
  %s0 = inlined_call_operand.vmem [shape: f32[2,16,64], index: 0, kind: input, shape index: {}]
  %s1 = inlined_call_operand.vmem [shape: f32[3,72,128], index: 1, kind: input, shape index: {}]
  %s2 = inlined_call_operand.vmem [shape: f32[1,128], index: 2, kind: input, shape index: {}]
  %s3 = inlined_call_operand.hbm [shape: f32[3,144,128], index: 3, kind: input, shape index: {}]
  %s4 = inlined_call_operand.vmem [shape: f32[1,128], index: 4, kind: input, shape index: {}]
  %s5 = inlined_call_operand.vmem [shape: f32[2,128,64], index: 5, kind: input, shape index: {}]
  %s6 = inlined_call_operand.hbm [shape: f32[2,8,64], index: 6, kind: output, shape index: {}]
  %s7 = sld [smem:[#allocation0]]
  $region61: #{tpu_custom_call.1} parent=0
    _
  %s9 = ssub.s32 1, %s7
  %s10 = scalar_select 0, %s9, %s7
  $region1: #{tpu_custom_call.1} parent=0
    #allocation4 [shape = 'u8[221184]{0}', space=vmem, size = 0x36000, scoped, tag = 'input window, operand 3, single buffered']
    #allocation5 [shape = 's32[2]{0}', space=sflag, size = 0x8, scoped, tag = 'scoped memory for tpu_custom_call.1']
    #allocation6 [shape = 's32[2]{0}', space=sflag, size = 0x8, scoped, tag = 'scoped memory for tpu_custom_call.1']
    #allocation7 [shape = 'u8[8192]{0}', space=vmem, size = 0x2000, scoped, tag = 'output window, operand 0']
    %11 = vsyncpa [#allocation5], 0
    %12 = vsyncpa [#allocation6], 0
    %s13 = scalar_lea.sflag [#allocation6], 1
    %14 = vsyncpa %s13, 0
    loop: start=0, step=1, limit=4
    $region2: #{tpu_custom_call.1} parent=1 // loop_pre_header
      _
    $region3: #{tpu_custom_call.1} parent=1 // loop_header
      %s16 = sphi 0, %s20
      %p17 = scmp.ge.s32.totalorder %s16, 4
      %s26 = sphi 0, %s28
      %s29 = sphi 0, %s26
      %s30 = sphi 0, %s29
      %s46 = sphi 0, %s30
      %s50 = sphi 0, %s50
      %s52 = sphi 0, %s50
      %s53 = sphi 0, %s52
      %s67 = sphi 0, %s53
      %s71 = sphi 0, %s71
      %s73 = sphi 0, %s71
      %s74 = sphi 0, %s73
      %s88 = sphi 0, %s74
      %s92 = sphi 0, %s92
      %s94 = sphi 0, %s92
      %s95 = sphi 0, %s94
      %s109 = sphi 0, %s95
      %s113 = sphi 0, %s113
      %s115 = sphi 0, %s113
      %s116 = sphi 0, %s115
      %s130 = sphi 0, %s116
      %s134 = sphi 0, %s134
      %s136 = sphi 0, %s134
      %s137 = sphi 0, %s136
      %s151 = sphi 0, %s137
      %s157 = sphi 0, %s159
      %s160 = sphi 0, %s157
      %s161 = sphi 0, %s160
      %s177 = sphi 0, %s161
    $region4: #{tpu_custom_call.1} parent=1 // loop_header_branch
      %19 = sbr.rel (%p17) target = $region8
    $region5: #{tpu_custom_call.1} parent=1 // loop_body
      %s21 = ssub.s32 %s16, 1
      %s22 = ssub.s32 %s16, 2
      %s23 = sadd.s32 %s16, 1
      %s24 = ssub.s32 %s16, %s23
      %p25 = scmp.eq.s32.totalorder %s24, 0
      %s27 = sadd.s32 %s26, 1
      %s28 = scalar_select %p25, %s26, %s27
      %p31 = pneg %p25
      %p32 = scmp.eq.s32.totalorder %s16, 1
      %p33 = por %p31, %p32
      %p34 = scmp.ne.s32.totalorder %s26, %s29
      %p35 = scmp.eq.s32.totalorder %s16, 0
      %p36 = por %p34, %p35
      %p37 = scmp.ne.s32.totalorder %s26, %s29
      %p38 = scmp.eq.s32.totalorder %s21, 1
      %p39 = por %p37, %p38
      %p40 = scmp.ne.s32.totalorder %s29, %s30
      %p41 = scmp.eq.s32.totalorder %s21, 0
      %p42 = por %p40, %p41
      %p43 = scmp.ne.s32.totalorder %s29, %s30
      %p44 = scmp.eq.s32.totalorder %s22, 1
      %p45 = por %p43, %p44
      %p47 = scmp.ne.s32.totalorder %s30, %s46
      %p48 = scmp.eq.s32.totalorder %s22, 0
      %p49 = por %p47, %p48
      %s51 = sadd.s32 %s50, 1
      %p54 = scmp.eq.s32.totalorder %s16, 1
      %p55 = scmp.ne.s32.totalorder %s50, %s52
      %p56 = scmp.eq.s32.totalorder %s16, 0
      %p57 = por %p55, %p56
      %p58 = scmp.ne.s32.totalorder %s50, %s52
      %p59 = scmp.eq.s32.totalorder %s21, 1
      %p60 = por %p58, %p59
      %p61 = scmp.ne.s32.totalorder %s52, %s53
      %p62 = scmp.eq.s32.totalorder %s21, 0
      %p63 = por %p61, %p62
      %p64 = scmp.ne.s32.totalorder %s52, %s53
      %p65 = scmp.eq.s32.totalorder %s22, 1
      %p66 = por %p64, %p65
      %p68 = scmp.ne.s32.totalorder %s53, %s67
      %p69 = scmp.eq.s32.totalorder %s22, 0
      %p70 = por %p68, %p69
      %s72 = sadd.s32 %s71, 1
      %p75 = scmp.eq.s32.totalorder %s16, 1
      %p76 = scmp.ne.s32.totalorder %s71, %s73
      %p77 = scmp.eq.s32.totalorder %s16, 0
      %p78 = por %p76, %p77
      %p79 = scmp.ne.s32.totalorder %s71, %s73
      %p80 = scmp.eq.s32.totalorder %s21, 1
      %p81 = por %p79, %p80
      %p82 = scmp.ne.s32.totalorder %s73, %s74
      %p83 = scmp.eq.s32.totalorder %s21, 0
      %p84 = por %p82, %p83
      %p85 = scmp.ne.s32.totalorder %s73, %s74
      %p86 = scmp.eq.s32.totalorder %s22, 1
      %p87 = por %p85, %p86
      %p89 = scmp.ne.s32.totalorder %s74, %s88
      %p90 = scmp.eq.s32.totalorder %s22, 0
      %p91 = por %p89, %p90
      %s93 = sadd.s32 %s92, 1
      %p96 = scmp.eq.s32.totalorder %s16, 1
      %p97 = scmp.ne.s32.totalorder %s92, %s94
      %p98 = scmp.eq.s32.totalorder %s16, 0
      %p99 = por %p97, %p98
      %p100 = scmp.ne.s32.totalorder %s92, %s94
      %p101 = scmp.eq.s32.totalorder %s21, 1
      %p102 = por %p100, %p101
      %p103 = scmp.ne.s32.totalorder %s94, %s95
      %p104 = scmp.eq.s32.totalorder %s21, 0
      %p105 = por %p103, %p104
      %p106 = scmp.ne.s32.totalorder %s94, %s95
      %p107 = scmp.eq.s32.totalorder %s22, 1
      %p108 = por %p106, %p107
      %p110 = scmp.ne.s32.totalorder %s95, %s109
      %p111 = scmp.eq.s32.totalorder %s22, 0
      %p112 = por %p110, %p111
      %s114 = sadd.s32 %s113, 1
      %p117 = scmp.eq.s32.totalorder %s16, 1
      %p118 = scmp.ne.s32.totalorder %s113, %s115
      %p119 = scmp.eq.s32.totalorder %s16, 0
      %p120 = por %p118, %p119
      %p121 = scmp.ne.s32.totalorder %s113, %s115
      %p122 = scmp.eq.s32.totalorder %s21, 1
      %p123 = por %p121, %p122
      %p124 = scmp.ne.s32.totalorder %s115, %s116
      %p125 = scmp.eq.s32.totalorder %s21, 0
      %p126 = por %p124, %p125
      %p127 = scmp.ne.s32.totalorder %s115, %s116
      %p128 = scmp.eq.s32.totalorder %s22, 1
      %p129 = por %p127, %p128
      %p131 = scmp.ne.s32.totalorder %s116, %s130
      %p132 = scmp.eq.s32.totalorder %s22, 0
      %p133 = por %p131, %p132
      %s135 = sadd.s32 %s134, 1
      %p138 = scmp.eq.s32.totalorder %s16, 1
      %p139 = scmp.ne.s32.totalorder %s134, %s136
      %p140 = scmp.eq.s32.totalorder %s16, 0
      %p141 = por %p139, %p140
      %p142 = scmp.ne.s32.totalorder %s134, %s136
      %p143 = scmp.eq.s32.totalorder %s21, 1
      %p144 = por %p142, %p143
      %p145 = scmp.ne.s32.totalorder %s136, %s137
      %p146 = scmp.eq.s32.totalorder %s21, 0
      %p147 = por %p145, %p146
      %p148 = scmp.ne.s32.totalorder %s136, %s137
      %p149 = scmp.eq.s32.totalorder %s22, 1
      %p150 = por %p148, %p149
      %p152 = scmp.ne.s32.totalorder %s137, %s151
      %p153 = scmp.eq.s32.totalorder %s22, 0
      %p154 = por %p152, %p153
      %s155 = ssub.s32 %s16, %s23
      %p156 = scmp.eq.s32.totalorder %s155, 0
      %s158 = sadd.s32 %s157, 1
      %s159 = scalar_select %p156, %s157, %s158
      %p162 = pneg %p156
      %p163 = scmp.eq.s32.totalorder %s16, 1
      %p164 = por %p162, %p163
      %p165 = scmp.ne.s32.totalorder %s157, %s160
      %p166 = scmp.eq.s32.totalorder %s16, 0
      %p167 = por %p165, %p166
      %p168 = scmp.ne.s32.totalorder %s157, %s160
      %p169 = scmp.eq.s32.totalorder %s21, 1
      %p170 = por %p168, %p169
      %p171 = scmp.ne.s32.totalorder %s160, %s161
      %p172 = scmp.eq.s32.totalorder %s21, 0
      %p173 = por %p171, %p172
      %p174 = scmp.ne.s32.totalorder %s160, %s161
      %p175 = scmp.eq.s32.totalorder %s22, 1
      %p176 = por %p174, %p175
      %p178 = scmp.ne.s32.totalorder %s161, %s177
      %p179 = scmp.eq.s32.totalorder %s22, 0
      %p180 = por %p178, %p179
      %p181 = scmp.le.s32.totalorder 1, %s16
      %p182 = scmp.lt.s32.totalorder %s16, 3
      %p183 = pnand %p181, %p182
      %p184 = pneg %p183
      // Predicated region
      $region9: #{tpu_custom_call.1} parent=5 // pred_check
        _
      $region10: #{tpu_custom_call.1} parent=5 // pred_check_branch
        %186 = sbr.rel (%p183) target = $region12
      $region11: #{tpu_custom_call.1} parent=5 // pred_region
        %s187 = ssub.s32 %s16, 1
        // Predicated region
        $region13: #{tpu_custom_call.1} parent=11 // pred_check
          %p188 = pneg %p63
        $region14: #{tpu_custom_call.1} parent=11 // pred_check_branch
          %190 = sbr.rel (%p188) target = $region16
        $region15: #{tpu_custom_call.1} parent=11 // pred_region
          _
        $region16: #{tpu_custom_call.1} parent=11 // pred_fallthru
          _
        // Predicated region
        $region17: #{tpu_custom_call.1} parent=11 // pred_check
          %p191 = pneg %p84
        $region18: #{tpu_custom_call.1} parent=11 // pred_check_branch
          %193 = sbr.rel (%p191) target = $region20
        $region19: #{tpu_custom_call.1} parent=11 // pred_region
          _
        $region20: #{tpu_custom_call.1} parent=11 // pred_fallthru
          _
        // Predicated region
        $region21: #{tpu_custom_call.1} parent=11 // pred_check
          %p194 = pneg %p105
        $region22: #{tpu_custom_call.1} parent=11 // pred_check_branch
          %196 = sbr.rel (%p194) target = $region24
        $region23: #{tpu_custom_call.1} parent=11 // pred_region
          %s198 = ssub.s32 6912, 6912
          %199 = vsyncadd [#allocation5], %s198
          %s200 = sshll.u32 [#allocation4], 4
          %s201 = int_to_ptr.vmem [resolvable:$true] %s200
          %206 = dma.hbm_to_vmem [thread:$0]  %s3, 6912, %s201, [#allocation5], 128, 128, 8
        $region24: #{tpu_custom_call.1} parent=11 // pred_fallthru
          _
        // Predicated region
        $region25: #{tpu_custom_call.1} parent=11 // pred_check
          %p207 = pneg %p126
        $region26: #{tpu_custom_call.1} parent=11 // pred_check_branch
          %209 = sbr.rel (%p207) target = $region28
        $region27: #{tpu_custom_call.1} parent=11 // pred_region
          _
        $region28: #{tpu_custom_call.1} parent=11 // pred_fallthru
          _
        // Predicated region
        $region29: #{tpu_custom_call.1} parent=11 // pred_check
          %p210 = pneg %p147
        $region30: #{tpu_custom_call.1} parent=11 // pred_check_branch
          %212 = sbr.rel (%p210) target = $region32
        $region31: #{tpu_custom_call.1} parent=11 // pred_region
          _
        $region32: #{tpu_custom_call.1} parent=11 // pred_fallthru
          _
      $region12: #{tpu_custom_call.1} parent=5 // pred_fallthru
        _
      %p213 = scmp.lt.s32.totalorder %s16, 2
      // Predicated region
      $region33: #{tpu_custom_call.1} parent=5 // pred_check
        %p214 = pneg %p213
      $region34: #{tpu_custom_call.1} parent=5 // pred_check_branch
        %216 = sbr.rel (%p214) target = $region36
      $region35: #{tpu_custom_call.1} parent=5 // pred_region
        // Predicated region
        $region37: #{tpu_custom_call.1} parent=35 // pred_check
          %p217 = pneg %p36
        $region38: #{tpu_custom_call.1} parent=35 // pred_check_branch
          %219 = sbr.rel (%p217) target = $region40
        $region39: #{tpu_custom_call.1} parent=35 // pred_region
          %p220 = scmp.lt.s32.totalorder %s16, 1
          %s221 = scalar_select %p220, %s16, 1
          %s222 = smul.addr %s221, 2
          %s223 = smul.addr %s222, 8
          %s224 = scalar_lea.vmem %s0, %s223
        $region40: #{tpu_custom_call.1} parent=35 // pred_fallthru
          _
      $region36: #{tpu_custom_call.1} parent=5 // pred_fallthru
        _
      %p225 = scmp.le.s32.totalorder 1, %s16
      %p226 = scmp.lt.s32.totalorder %s16, 3
      %p227 = pnand %p225, %p226
      %p228 = pneg %p227
      // Predicated region
      $region41: #{tpu_custom_call.1} parent=5 // pred_check
        _
      $region42: #{tpu_custom_call.1} parent=5 // pred_check_branch
        %230 = sbr.rel (%p227) target = $region44
      $region43: #{tpu_custom_call.1} parent=5 // pred_region
        %s231 = ssub.s32 %s16, 1
        // Predicated region
        $region45: #{tpu_custom_call.1} parent=43 // pred_check
          %p232 = pneg %p105
        $region46: #{tpu_custom_call.1} parent=43 // pred_check_branch
          %234 = sbr.rel (%p232) target = $region48
        $region47: #{tpu_custom_call.1} parent=43 // pred_region
          %235 = dma.done [#allocation5], 6912
        $region48: #{tpu_custom_call.1} parent=43 // pred_fallthru
          _
        %p236 = scmp.lt.s32.totalorder %s21, 1
        %s237 = scalar_select %p236, %s21, 1
        %s238 = smul.addr %s237, 2
        %s239 = smul.addr %s238, 8
        %s240 = scalar_lea.vmem %s0, %s239
        %p241 = pneg %p42
        %p242 = pneg %p39
        %p243 = pneg %p63
        %p244 = pneg %p60
        %p245 = pneg %p84
        %p246 = pneg %p81
        %p247 = pneg %p105
        %p248 = pneg %p102
        %p249 = pneg %p126
        %p250 = pneg %p123
        %p251 = pneg %p147
        %p252 = pneg %p144
        %p253 = pneg %p173
        %p254 = pneg %p170
        %s255 = sand.u32 %s160, 1
        %s256 = scalar_lea.sflag [#allocation6], %s255
        %s257 = sand.u32 %s160, 1
        %s258 = smul.addr %s257, 8
        %s259 = scalar_lea.vmem [#allocation7], %s258
        %p260 = scmp.lt.s32.totalorder %s21, 1
        %s261 = scalar_select %p260, %s21, 1
        %s262 = smul.addr %s261, 2
        %s263 = smul.addr %s262, 8
        %s264 = scalar_lea.vmem %s0, %s263
        %vm265 = vcmask 588800
        %266 = vst.msk [vmem:[#allocation2] sm:$0xff] %vm265, 0.0
        %267 = vst.msk [vmem:[#allocation2 + $0x8] sm:$0xff] %vm265, 0.0
        %vm268 = vcmask 582656
        %269 = vst.msk [vmem:[#allocation2 + $0x10] sm:$0x3] %vm268, 0.0
        %v270 = vld [vmem:[%s264] sm:$0xff]
        %v271 = vld [vmem:[%s264 + $0x8] sm:$0xff]
        %274 = vrot.lane.b32.xlu0 %v270, 4
        %v275 = vpop.permute.xlu0 %274
        %276 = vrot.lane.b32.xlu0 %v271, 4
        %v277 = vpop.permute.xlu0 %276
        %vm280 = vcmask 556064
        %281 = vst.msk [vmem:[#allocation2 + $0x1] sm:$0xff] %vm280, %v275
        %282 = vst.msk [vmem:[#allocation2 + $0x9] sm:$0xff] %vm280, %v277
        %v283 = vld [vmem:[#allocation2] sm:$0xff]
        %v284 = vld [vmem:[#allocation2 + $0x8] sm:$0xff]
        %v285 = vld [vmem:[%s1] sm:$0xff]
        %v286 = vld [vmem:[%s1 + $0x8] sm:$0xff]
        %v287 = vld [vmem:[%s1 + $0x10] sm:$0xff]
        %v288 = vld [vmem:[%s1 + $0x18] sm:$0xff]
        %v289 = vld [vmem:[%s1 + $0x20] sm:$0xff]
        %v290 = vld [vmem:[%s1 + $0x28] sm:$0xff]
        %v291 = vld [vmem:[%s1 + $0x30] sm:$0xff]
        %v292 = vld [vmem:[%s1 + $0x38] sm:$0xff]
        %v293 = vld [vmem:[%s1 + $0x40] sm:$0xff]
        %v294 = vld [vmem:[#allocation2 + $0x1] sm:$0xff]
        %v295 = vld [vmem:[#allocation2 + $0x9] sm:$0xff]
        %s296 = scalar_lea.vmem %s1, 72
        %v297 = vld [vmem:[%s296] sm:$0xff]
        %v298 = vld [vmem:[%s296 + $0x8] sm:$0xff]
        %v299 = vld [vmem:[%s296 + $0x10] sm:$0xff]
        %v300 = vld [vmem:[%s296 + $0x18] sm:$0xff]
        %v301 = vld [vmem:[%s296 + $0x20] sm:$0xff]
        %v302 = vld [vmem:[%s296 + $0x28] sm:$0xff]
        %v303 = vld [vmem:[%s296 + $0x30] sm:$0xff]
        %v304 = vld [vmem:[%s296 + $0x38] sm:$0xff]
        %v305 = vld [vmem:[%s296 + $0x40] sm:$0xff]
        %v307 = vsel %vm265, %v294, 0
        %v310 = vsel %vm265, %v295, 0
        %312 = vmatprep.subr.mxu0 0.0
        %313 = vmatpush1.msra.mxu0 %v297
        %314 = vmatprep.subr.mxu0 0.0
        %315 = vmatpush1.msra.mxu0 %v298
        %316 = vmatprep.subr.mxu0 0.0
        %317 = vmatpush1.msra.mxu0 %v299
        %318 = vmatprep.subr.mxu0 0.0
        %319 = vmatpush1.msra.mxu0 %v300
        %320 = vmatprep.subr.mxu0 0.0
        %321 = vmatpush1.msra.mxu0 %v301
        %322 = vmatprep.subr.mxu0 0.0
        %323 = vmatpush1.msra.mxu0 %v302
        %324 = vmatprep.subr.mxu0 0.0
        %325 = vmatpush1.msra.mxu0 %v303
        %326 = vmatprep.subr.mxu0 0.0
        %327 = vmatpush1.msra.mxu0 %v304
        %328 = vmatprep.subr.mxu0 0.0
        %329 = vmatpush1.msra.mxu0 %v305
        %330 = vmatprep.subr.mxu0 0.0
        %331 = vmatpush1.msra.mxu0 0.0
        %332 = vmatprep.subr.mxu0 0.0
        %333 = vmatpush1.msra.mxu0 0.0
        %334 = vmatprep.subr.mxu0 0.0
        %335 = vmatpush1.msra.mxu0 0.0
        %336 = vmatprep.subr.mxu0 0.0
        %337 = vmatpush1.msra.mxu0 0.0
        %338 = vmatprep.subr.mxu0 0.0
        %339 = vmatpush1.msra.mxu0 0.0
        %340 = vmatprep.subr.mxu0 0.0
        %341 = vmatpush1.msra.mxu0 0.0
        %342 = vmatprep.subr.mxu0 0.0
        %343 = vmatpush1.msra.mxu0 0.0
        %344 = vmatprep.subr.mxu0 0.0
        %345 = vmatpush1.msra.mxu0 0.0
        %346 = vmatprep.subr.mxu0 0.0
        %347 = vmatpush1.msra.mxu0 0.0
        %348 = vmatprep.subr.mxu0 0.0
        %349 = vmatpush1.msra.mxu0 0.0
        %350 = vmatprep.subr.mxu0 0.0
        %351 = vmatpush1.msra.mxu0 0.0
        %352 = vmatprep.subr.mxu0 0.0
        %353 = vmatpush1.msra.mxu0 0.0
        %354 = vmatprep.subr.mxu0 0.0
        %355 = vmatpush1.msra.mxu0 0.0
        %356 = vmatprep.subr.mxu0 0.0
        %357 = vmatpush1.msra.mxu0 0.0
        %358 = vmatprep.subr.mxu0 0.0
        %359 = vmatpush1.msra.mxu0 0.0
        %360 = vmatprep.subr.mxu0 0.0
        %361 = vmatpush1.msra.mxu0 0.0
        %362 = vmatprep.subr.mxu0 0.0
        %363 = vmatpush1.msra.mxu0 0.0
        %364 = vmatprep.subr.mxu0 0.0
        %365 = vmatpush1.msra.mxu0 0.0
        %366 = vmatprep.subr.mxu0 0.0
        %367 = vmatpush1.msra.mxu0 0.0
        %368 = vmatprep.subr.mxu0 0.0
        %369 = vmatpush1.msra.mxu0 0.0
        %370 = vmatprep.subr.mxu0 0.0
        %371 = vmatpush1.msra.mxu0 0.0
        %372 = vmatprep.subr.mxu0 0.0
        %373 = vmatpush1.msra.mxu0 0.0
        %374 = vmatprep.subr.mxu0 0.0
        %375 = vmatpush1.msra.mxu0 0.0
        %376 = vmatprep.mubr.f32.mxu0 0.0
        %377 = vmatmul.mubr.f32.gmra.mrb[0].mxu0 %v307
        %v378 = vpop.f32.mrb[0].mxu0
        %v379 = vadd.f32 0.0, %v378
        %v380 = vpop.f32.mrb[0].mxu0
        %381 = vmatprep.mubr.f32.mxu0 0.0
        %382 = vmatmul.mubr.f32.gmra.mrb[0].mxu0 %v310
        %v383 = vpop.f32.mrb[0].mxu0
        %v384 = vadd.f32 0.0, %v383
        %v385 = vpop.f32.mrb[0].mxu0
        %386 = vdwg.mxu0
        %v388 = vsel %vm265, %v283, 0
        %v391 = vsel %vm265, %v284, 0
        %393 = vmatprep.subr.mxu0 0.0
        %394 = vmatpush1.msra.mxu0 %v285
        %395 = vmatprep.subr.mxu0 0.0
        %396 = vmatpush1.msra.mxu0 %v286
        %397 = vmatprep.subr.mxu0 0.0
        %398 = vmatpush1.msra.mxu0 %v287
        %399 = vmatprep.subr.mxu0 0.0
        %400 = vmatpush1.msra.mxu0 %v288
        %401 = vmatprep.subr.mxu0 0.0
        %402 = vmatpush1.msra.mxu0 %v289
        %403 = vmatprep.subr.mxu0 0.0
        %404 = vmatpush1.msra.mxu0 %v290
        %405 = vmatprep.subr.mxu0 0.0
        %406 = vmatpush1.msra.mxu0 %v291
        %407 = vmatprep.subr.mxu0 0.0
        %408 = vmatpush1.msra.mxu0 %v292
        %409 = vmatprep.subr.mxu0 0.0
        %410 = vmatpush1.msra.mxu0 %v293
        %411 = vmatprep.subr.mxu0 0.0
        %412 = vmatpush1.msra.mxu0 0.0
        %413 = vmatprep.subr.mxu0 0.0
        %414 = vmatpush1.msra.mxu0 0.0
        %415 = vmatprep.subr.mxu0 0.0
        %416 = vmatpush1.msra.mxu0 0.0
        %417 = vmatprep.subr.mxu0 0.0
        %418 = vmatpush1.msra.mxu0 0.0
        %419 = vmatprep.subr.mxu0 0.0
        %420 = vmatpush1.msra.mxu0 0.0
        %421 = vmatprep.subr.mxu0 0.0
        %422 = vmatpush1.msra.mxu0 0.0
        %423 = vmatprep.subr.mxu0 0.0
        %424 = vmatpush1.msra.mxu0 0.0
        %425 = vmatprep.subr.mxu0 0.0
        %426 = vmatpush1.msra.mxu0 0.0
        %427 = vmatprep.subr.mxu0 0.0
        %428 = vmatpush1.msra.mxu0 0.0
        %429 = vmatprep.subr.mxu0 0.0
        %430 = vmatpush1.msra.mxu0 0.0
        %431 = vmatprep.subr.mxu0 0.0
        %432 = vmatpush1.msra.mxu0 0.0
        %433 = vmatprep.subr.mxu0 0.0
        %434 = vmatpush1.msra.mxu0 0.0
        %435 = vmatprep.subr.mxu0 0.0
        %436 = vmatpush1.msra.mxu0 0.0
        %437 = vmatprep.subr.mxu0 0.0
        %438 = vmatpush1.msra.mxu0 0.0
        %439 = vmatprep.subr.mxu0 0.0
        %440 = vmatpush1.msra.mxu0 0.0
        %441 = vmatprep.subr.mxu0 0.0
        %442 = vmatpush1.msra.mxu0 0.0
        %443 = vmatprep.subr.mxu0 0.0
        %444 = vmatpush1.msra.mxu0 0.0
        %445 = vmatprep.subr.mxu0 0.0
        %446 = vmatpush1.msra.mxu0 0.0
        %447 = vmatprep.subr.mxu0 0.0
        %448 = vmatpush1.msra.mxu0 0.0
        %449 = vmatprep.subr.mxu0 0.0
        %450 = vmatpush1.msra.mxu0 0.0
        %451 = vmatprep.subr.mxu0 0.0
        %452 = vmatpush1.msra.mxu0 0.0
        %453 = vmatprep.subr.mxu0 0.0
        %454 = vmatpush1.msra.mxu0 0.0
        %455 = vmatprep.subr.mxu0 0.0
        %456 = vmatpush1.msra.mxu0 0.0
        %457 = vmatprep.mubr.f32.mxu0 0.0
        %458 = vmatmul.mubr.f32.gmra.mrb[0].mxu0 %v388
        %v459 = vpop.f32.mrb[0].mxu0
        %v460 = vadd.f32 %v379, %v459
        %v461 = vpop.f32.mrb[0].mxu0
        %462 = vmatprep.mubr.f32.mxu0 0.0
        %463 = vmatmul.mubr.f32.gmra.mrb[0].mxu0 %v391
        %v464 = vpop.f32.mrb[0].mxu0
        %v465 = vadd.f32 %v384, %v464
        %v466 = vpop.f32.mrb[0].mxu0
        %467 = vdwg.mxu0
        %v468 = vld [vmem:[#allocation2 + $0x2] sm:$0xff]
        %v469 = vld [vmem:[#allocation2 + $0xa] sm:$0xff]
        %s470 = scalar_lea.vmem %s1, 144
        %v471 = vld [vmem:[%s470] sm:$0xff]
        %v472 = vld [vmem:[%s470 + $0x8] sm:$0xff]
        %v473 = vld [vmem:[%s470 + $0x10] sm:$0xff]
        %v474 = vld [vmem:[%s470 + $0x18] sm:$0xff]
        %v475 = vld [vmem:[%s470 + $0x20] sm:$0xff]
        %v476 = vld [vmem:[%s470 + $0x28] sm:$0xff]
        %v477 = vld [vmem:[%s470 + $0x30] sm:$0xff]
        %v478 = vld [vmem:[%s470 + $0x38] sm:$0xff]
        %v479 = vld [vmem:[%s470 + $0x40] sm:$0xff]
        %v481 = vsel %vm265, %v468, 0
        %v484 = vsel %vm265, %v469, 0
        %486 = vmatprep.subr.mxu0 0.0
        %487 = vmatpush1.msra.mxu0 %v471
        %488 = vmatprep.subr.mxu0 0.0
        %489 = vmatpush1.msra.mxu0 %v472
        %490 = vmatprep.subr.mxu0 0.0
        %491 = vmatpush1.msra.mxu0 %v473
        %492 = vmatprep.subr.mxu0 0.0
        %493 = vmatpush1.msra.mxu0 %v474
        %494 = vmatprep.subr.mxu0 0.0
        %495 = vmatpush1.msra.mxu0 %v475
        %496 = vmatprep.subr.mxu0 0.0
        %497 = vmatpush1.msra.mxu0 %v476
        %498 = vmatprep.subr.mxu0 0.0
        %499 = vmatpush1.msra.mxu0 %v477
        %500 = vmatprep.subr.mxu0 0.0
        %501 = vmatpush1.msra.mxu0 %v478
        %502 = vmatprep.subr.mxu0 0.0
        %503 = vmatpush1.msra.mxu0 %v479
        %504 = vmatprep.subr.mxu0 0.0
        %505 = vmatpush1.msra.mxu0 0.0
        %506 = vmatprep.subr.mxu0 0.0
        %507 = vmatpush1.msra.mxu0 0.0
        %508 = vmatprep.subr.mxu0 0.0
        %509 = vmatpush1.msra.mxu0 0.0
        %510 = vmatprep.subr.mxu0 0.0
        %511 = vmatpush1.msra.mxu0 0.0
        %512 = vmatprep.subr.mxu0 0.0
        %513 = vmatpush1.msra.mxu0 0.0
        %514 = vmatprep.subr.mxu0 0.0
        %515 = vmatpush1.msra.mxu0 0.0
        %516 = vmatprep.subr.mxu0 0.0
        %517 = vmatpush1.msra.mxu0 0.0
        %518 = vmatprep.subr.mxu0 0.0
        %519 = vmatpush1.msra.mxu0 0.0
        %520 = vmatprep.subr.mxu0 0.0
        %521 = vmatpush1.msra.mxu0 0.0
        %522 = vmatprep.subr.mxu0 0.0
        %523 = vmatpush1.msra.mxu0 0.0
        %524 = vmatprep.subr.mxu0 0.0
        %525 = vmatpush1.msra.mxu0 0.0
        %526 = vmatprep.subr.mxu0 0.0
        %527 = vmatpush1.msra.mxu0 0.0
        %528 = vmatprep.subr.mxu0 0.0
        %529 = vmatpush1.msra.mxu0 0.0
        %530 = vmatprep.subr.mxu0 0.0
        %531 = vmatpush1.msra.mxu0 0.0
        %532 = vmatprep.subr.mxu0 0.0
        %533 = vmatpush1.msra.mxu0 0.0
        %534 = vmatprep.subr.mxu0 0.0
        %535 = vmatpush1.msra.mxu0 0.0
        %536 = vmatprep.subr.mxu0 0.0
        %537 = vmatpush1.msra.mxu0 0.0
        %538 = vmatprep.subr.mxu0 0.0
        %539 = vmatpush1.msra.mxu0 0.0
        %540 = vmatprep.subr.mxu0 0.0
        %541 = vmatpush1.msra.mxu0 0.0
        %542 = vmatprep.subr.mxu0 0.0
        %543 = vmatpush1.msra.mxu0 0.0
        %544 = vmatprep.subr.mxu0 0.0
        %545 = vmatpush1.msra.mxu0 0.0
        %546 = vmatprep.subr.mxu0 0.0
        %547 = vmatpush1.msra.mxu0 0.0
        %548 = vmatprep.subr.mxu0 0.0
        %549 = vmatpush1.msra.mxu0 0.0
        %550 = vmatprep.mubr.f32.mxu0 0.0
        %551 = vmatmul.mubr.f32.gmra.mrb[0].mxu0 %v481
        %v552 = vpop.f32.mrb[0].mxu0
        %v553 = vadd.f32 0.0, %v552
        %v554 = vpop.f32.mrb[0].mxu0
        %555 = vmatprep.mubr.f32.mxu0 0.0
        %556 = vmatmul.mubr.f32.gmra.mrb[0].mxu0 %v484
        %v557 = vpop.f32.mrb[0].mxu0
        %v558 = vadd.f32 0.0, %v557
        %v559 = vpop.f32.mrb[0].mxu0
        %560 = vdwg.mxu0
        %v561 = vadd.f32 %v460, %v553
        %v562 = vadd.f32 %v465, %v558
        %v563 = vld [vmem:[%s2] sm:$0x1]
        %v565 = vlaneseq
        %v566 = vshrl.u32 %v565, 7
        %v567 = vsub.s32 0, %v566
        %v568 = vrot.slane %v563, %v567
        %v570 = vadd.f32 %v561, %v568
        %v571 = vadd.f32 %v562, %v568
        %v572 = vmax.f32 %v570, 0.0
        %v573 = vmax.f32 %v571, 0.0
        %574 = vst [vmem:[#allocation3] sm:$0xff] 0.0
        %vm575 = vcmask 130048
        %576 = vst.msk [vmem:[#allocation3 + $0x8] sm:$0xff] %vm575, 0.0
        %577 = vst [vmem:[#allocation3 + $0x10] sm:$0xff] 0.0
        %578 = vst.msk [vmem:[#allocation3 + $0x18] sm:$0xff] %vm575, 0.0
        %579 = vst [vmem:[#allocation3 + $0x20] sm:$0x3] 0.0
        %vm580 = vcmask 123904
        %581 = vst.msk [vmem:[#allocation3 + $0x28] sm:$0x3] %vm580, 0.0
        %vm584 = vcmask 1040384
        %v585 = vrot.slane %v572, 7
        %v586 = vrot.slane %v573, 7
        %v587 = vsel %vm584, %v585, %v586
        %588 = vrot.lane.b32.xlu0 %v585, 8
        %v589 = vpop.permute.xlu0 %588
        %590 = vrot.lane.b32.xlu0 %v587, 8
        %v591 = vpop.permute.xlu0 %590
        %592 = vrot.lane.b32.xlu0 %v586, 8
        %v593 = vpop.permute.xlu0 %592
        %vm597 = vcmask 1047617
        %598 = vst.msk [vmem:[#allocation3] sm:$0xfe] %vm597, %v589
        %vm599 = vcmask 64513
        %600 = vst.msk [vmem:[#allocation3 + $0x8] sm:$0xfe] %vm599, %v589
        %vm601 = vcmask 1047616
        %602 = vst.msk [vmem:[#allocation3 + $0x10] sm:$0xff] %vm601, %v591
        %vm603 = vcmask 64512
        %604 = vst.msk [vmem:[#allocation3 + $0x18] sm:$0xff] %vm603, %v591
        %vm605 = vcmask 1040448
        %606 = vst.msk [vmem:[#allocation3 + $0x20] sm:$0x1] %vm605, %v593
        %vm607 = vcmask 57344
        %608 = vst.msk [vmem:[#allocation3 + $0x28] sm:$0x1] %vm607, %v593
        %v609 = vld [vmem:[#allocation3] sm:$0xff]
        %v610 = vld [vmem:[#allocation3 + $0x8] sm:$0xff]
        %v611 = vld [vmem:[#allocation3 + $0x10] sm:$0xff]
        %v612 = vld [vmem:[#allocation3 + $0x18] sm:$0xff]
        %v613 = vld [vmem:[#allocation4] sm:$0xff]
        %v614 = vld [vmem:[#allocation4 + $0x8] sm:$0xff]
        %v615 = vld [vmem:[#allocation4 + $0x10] sm:$0xff]
        %v616 = vld [vmem:[#allocation4 + $0x18] sm:$0xff]
        %v617 = vld [vmem:[#allocation4 + $0x20] sm:$0xff]
        %v618 = vld [vmem:[#allocation4 + $0x28] sm:$0xff]
        %v619 = vld [vmem:[#allocation4 + $0x30] sm:$0xff]
        %v620 = vld [vmem:[#allocation4 + $0x38] sm:$0xff]
        %v621 = vld [vmem:[#allocation4 + $0x40] sm:$0xff]
        %v622 = vld [vmem:[#allocation4 + $0x48] sm:$0xff]
        %v623 = vld [vmem:[#allocation4 + $0x50] sm:$0xff]
        %v624 = vld [vmem:[#allocation4 + $0x58] sm:$0xff]
        %v625 = vld [vmem:[#allocation4 + $0x60] sm:$0xff]
        %v626 = vld [vmem:[#allocation4 + $0x68] sm:$0xff]
        %v627 = vld [vmem:[#allocation4 + $0x70] sm:$0xff]
        %v628 = vld [vmem:[#allocation4 + $0x78] sm:$0xff]
        %v629 = vld [vmem:[#allocation4 + $0x80] sm:$0xff]
        %v630 = vld [vmem:[#allocation4 + $0x88] sm:$0xff]
        %v631 = vld [vmem:[#allocation3] sm:$0xfe]
        %v632 = vld [vmem:[#allocation3 + $0x8] sm:$0xfe]
        %v633 = vld [vmem:[#allocation3 + $0x20] sm:$0x1]
        %v634 = vld [vmem:[#allocation3 + $0x28] sm:$0x1]
        %s635 = scalar_lea.vmem [#allocation4], 144
        %v636 = vld [vmem:[%s635] sm:$0xff]
        %v637 = vld [vmem:[%s635 + $0x8] sm:$0xff]
        %v638 = vld [vmem:[%s635 + $0x10] sm:$0xff]
        %v639 = vld [vmem:[%s635 + $0x18] sm:$0xff]
        %v640 = vld [vmem:[%s635 + $0x20] sm:$0xff]
        %v641 = vld [vmem:[%s635 + $0x28] sm:$0xff]
        %v642 = vld [vmem:[%s635 + $0x30] sm:$0xff]
        %v643 = vld [vmem:[%s635 + $0x38] sm:$0xff]
        %v644 = vld [vmem:[%s635 + $0x40] sm:$0xff]
        %v645 = vld [vmem:[%s635 + $0x48] sm:$0xff]
        %v646 = vld [vmem:[%s635 + $0x50] sm:$0xff]
        %v647 = vld [vmem:[%s635 + $0x58] sm:$0xff]
        %v648 = vld [vmem:[%s635 + $0x60] sm:$0xff]
        %v649 = vld [vmem:[%s635 + $0x68] sm:$0xff]
        %v650 = vld [vmem:[%s635 + $0x70] sm:$0xff]
        %v651 = vld [vmem:[%s635 + $0x78] sm:$0xff]
        %v652 = vld [vmem:[%s635 + $0x80] sm:$0xff]
        %v653 = vld [vmem:[%s635 + $0x88] sm:$0xff]
        %vm660 = vcmask 1046528
        %v661 = vrot.slane %v631, 1
        %v662 = vrot.slane %v611, 1
        %v663 = vsel %vm660, %v661, %v662
        %v664 = vrot.slane %v632, 1
        %v665 = vrot.slane %v612, 1
        %v666 = vsel %vm660, %v664, %v665
        %v667 = vrot.slane %v633, 1
        %v668 = vsel %vm660, %v662, %v667
        %v669 = vrot.slane %v634, 1
        %v670 = vsel %vm660, %v665, %v669
        %v673 = vsel %vm575, %v666, 0
        %v675 = vsel %vm575, %v670, 0
        %677 = vmatprep.subr.mxu0 0.0
        %678 = vmatpush1.msra.mxu0 %v636
        %679 = vmatprep.subr.mxu0 0.0
        %680 = vmatpush1.msra.mxu0 %v637
        %681 = vmatprep.subr.mxu0 0.0
        %682 = vmatpush1.msra.mxu0 %v638
        %683 = vmatprep.subr.mxu0 0.0
        %684 = vmatpush1.msra.mxu0 %v639
        %685 = vmatprep.subr.mxu0 0.0
        %686 = vmatpush1.msra.mxu0 %v640
        %687 = vmatprep.subr.mxu0 0.0
        %688 = vmatpush1.msra.mxu0 %v641
        %689 = vmatprep.subr.mxu0 0.0
        %690 = vmatpush1.msra.mxu0 %v642
        %691 = vmatprep.subr.mxu0 0.0
        %692 = vmatpush1.msra.mxu0 %v643
        %693 = vmatprep.subr.mxu0 0.0
        %694 = vmatpush1.msra.mxu0 %v644
        %695 = vmatprep.subr.mxu0 0.0
        %696 = vmatpush1.msra.mxu0 %v645
        %697 = vmatprep.subr.mxu0 0.0
        %698 = vmatpush1.msra.mxu0 %v646
        %699 = vmatprep.subr.mxu0 0.0
        %700 = vmatpush1.msra.mxu0 %v647
        %701 = vmatprep.subr.mxu0 0.0
        %702 = vmatpush1.msra.mxu0 %v648
        %703 = vmatprep.subr.mxu0 0.0
        %704 = vmatpush1.msra.mxu0 %v649
        %705 = vmatprep.subr.mxu0 0.0
        %706 = vmatpush1.msra.mxu0 %v650
        %707 = vmatprep.subr.mxu0 0.0
        %708 = vmatpush1.msra.mxu0 %v651
        %709 = vmatprep.subr.mxu0 0.0
        %710 = vmatpush1.msra.mxu0 %v652
        %711 = vmatprep.subr.mxu0 0.0
        %712 = vmatpush1.msra.mxu0 %v653
        %713 = vmatprep.subr.mxu0 0.0
        %714 = vmatpush1.msra.mxu0 0.0
        %715 = vmatprep.subr.mxu0 0.0
        %716 = vmatpush1.msra.mxu0 0.0
        %717 = vmatprep.subr.mxu0 0.0
        %718 = vmatpush1.msra.mxu0 0.0
        %719 = vmatprep.subr.mxu0 0.0
        %720 = vmatpush1.msra.mxu0 0.0
        %721 = vmatprep.subr.mxu0 0.0
        %722 = vmatpush1.msra.mxu0 0.0
        %723 = vmatprep.subr.mxu0 0.0
        %724 = vmatpush1.msra.mxu0 0.0
        %725 = vmatprep.subr.mxu0 0.0
        %726 = vmatpush1.msra.mxu0 0.0
        %727 = vmatprep.subr.mxu0 0.0
        %728 = vmatpush1.msra.mxu0 0.0
        %729 = vmatprep.subr.mxu0 0.0
        %730 = vmatpush1.msra.mxu0 0.0
        %731 = vmatprep.subr.mxu0 0.0
        %732 = vmatpush1.msra.mxu0 0.0
        %733 = vmatprep.subr.mxu0 0.0
        %734 = vmatpush1.msra.mxu0 0.0
        %735 = vmatprep.subr.mxu0 0.0
        %736 = vmatpush1.msra.mxu0 0.0
        %737 = vmatprep.subr.mxu0 0.0
        %738 = vmatpush1.msra.mxu0 0.0
        %739 = vmatprep.subr.mxu0 0.0
        %740 = vmatpush1.msra.mxu0 0.0
        %741 = vmatprep.mubr.f32.mxu0 %v673
        %742 = vmatmul.mubr.f32.gmra.mrb[0].mxu0 %v663
        %v743 = vpop.f32.mrb[0].mxu0
        %v744 = vadd.f32 0.0, %v743
        %v745 = vpop.f32.mrb[0].mxu0
        %746 = vmatprep.mubr.f32.mxu0 %v675
        %747 = vmatmul.mubr.f32.gmra.mrb[0].mxu0 %v668
        %v748 = vpop.f32.mrb[0].mxu0
        %v749 = vadd.f32 0.0, %v748
        %v750 = vpop.f32.mrb[0].mxu0
        %751 = vdwg.mxu0
        %v753 = vsel %vm575, %v610, 0
        %v755 = vsel %vm575, %v612, 0
        %757 = vmatprep.subr.mxu0 0.0
        %758 = vmatpush1.msra.mxu0 %v613
        %759 = vmatprep.subr.mxu0 0.0
        %760 = vmatpush1.msra.mxu0 %v614
        %761 = vmatprep.subr.mxu0 0.0
        %762 = vmatpush1.msra.mxu0 %v615
        %763 = vmatprep.subr.mxu0 0.0
        %764 = vmatpush1.msra.mxu0 %v616
        %765 = vmatprep.subr.mxu0 0.0
        %766 = vmatpush1.msra.mxu0 %v617
        %767 = vmatprep.subr.mxu0 0.0
        %768 = vmatpush1.msra.mxu0 %v618
        %769 = vmatprep.subr.mxu0 0.0
        %770 = vmatpush1.msra.mxu0 %v619
        %771 = vmatprep.subr.mxu0 0.0
        %772 = vmatpush1.msra.mxu0 %v620
        %773 = vmatprep.subr.mxu0 0.0
        %774 = vmatpush1.msra.mxu0 %v621
        %775 = vmatprep.subr.mxu0 0.0
        %776 = vmatpush1.msra.mxu0 %v622
        %777 = vmatprep.subr.mxu0 0.0
        %778 = vmatpush1.msra.mxu0 %v623
        %779 = vmatprep.subr.mxu0 0.0
        %780 = vmatpush1.msra.mxu0 %v624
        %781 = vmatprep.subr.mxu0 0.0
        %782 = vmatpush1.msra.mxu0 %v625
        %783 = vmatprep.subr.mxu0 0.0
        %784 = vmatpush1.msra.mxu0 %v626
        %785 = vmatprep.subr.mxu0 0.0
        %786 = vmatpush1.msra.mxu0 %v627
        %787 = vmatprep.subr.mxu0 0.0
        %788 = vmatpush1.msra.mxu0 %v628
        %789 = vmatprep.subr.mxu0 0.0
        %790 = vmatpush1.msra.mxu0 %v629
        %791 = vmatprep.subr.mxu0 0.0
        %792 = vmatpush1.msra.mxu0 %v630
        %793 = vmatprep.subr.mxu0 0.0
        %794 = vmatpush1.msra.mxu0 0.0
        %795 = vmatprep.subr.mxu0 0.0
        %796 = vmatpush1.msra.mxu0 0.0
        %797 = vmatprep.subr.mxu0 0.0
        %798 = vmatpush1.msra.mxu0 0.0
        %799 = vmatprep.subr.mxu0 0.0
        %800 = vmatpush1.msra.mxu0 0.0
        %801 = vmatprep.subr.mxu0 0.0
        %802 = vmatpush1.msra.mxu0 0.0
        %803 = vmatprep.subr.mxu0 0.0
        %804 = vmatpush1.msra.mxu0 0.0
        %805 = vmatprep.subr.mxu0 0.0
        %806 = vmatpush1.msra.mxu0 0.0
        %807 = vmatprep.subr.mxu0 0.0
        %808 = vmatpush1.msra.mxu0 0.0
        %809 = vmatprep.subr.mxu0 0.0
        %810 = vmatpush1.msra.mxu0 0.0
        %811 = vmatprep.subr.mxu0 0.0
        %812 = vmatpush1.msra.mxu0 0.0
        %813 = vmatprep.subr.mxu0 0.0
        %814 = vmatpush1.msra.mxu0 0.0
        %815 = vmatprep.subr.mxu0 0.0
        %816 = vmatpush1.msra.mxu0 0.0
        %817 = vmatprep.subr.mxu0 0.0
        %818 = vmatpush1.msra.mxu0 0.0
        %819 = vmatprep.subr.mxu0 0.0
        %820 = vmatpush1.msra.mxu0 0.0
        %821 = vmatprep.mubr.f32.mxu0 %v753
        %822 = vmatmul.mubr.f32.gmra.mrb[0].mxu0 %v609
        %v823 = vpop.f32.mrb[0].mxu0
        %v824 = vadd.f32 %v744, %v823
        %v825 = vpop.f32.mrb[0].mxu0
        %826 = vmatprep.mubr.f32.mxu0 %v755
        %827 = vmatmul.mubr.f32.gmra.mrb[0].mxu0 %v611
        %v828 = vpop.f32.mrb[0].mxu0
        %v829 = vadd.f32 %v749, %v828
        %v830 = vpop.f32.mrb[0].mxu0
        %831 = vdwg.mxu0
        %v832 = vld [vmem:[#allocation3] sm:$0xfc]
        %v833 = vld [vmem:[#allocation3 + $0x8] sm:$0xfc]
        %v834 = vld [vmem:[#allocation3 + $0x20] sm:$0x3]
        %v835 = vld [vmem:[#allocation3 + $0x28] sm:$0x3]
        %s836 = scalar_lea.vmem [#allocation4], 288
        %v837 = vld [vmem:[%s836] sm:$0xff]
        %v838 = vld [vmem:[%s836 + $0x8] sm:$0xff]
        %v839 = vld [vmem:[%s836 + $0x10] sm:$0xff]
        %v840 = vld [vmem:[%s836 + $0x18] sm:$0xff]
        %v841 = vld [vmem:[%s836 + $0x20] sm:$0xff]
        %v842 = vld [vmem:[%s836 + $0x28] sm:$0xff]
        %v843 = vld [vmem:[%s836 + $0x30] sm:$0xff]
        %v844 = vld [vmem:[%s836 + $0x38] sm:$0xff]
        %v845 = vld [vmem:[%s836 + $0x40] sm:$0xff]
        %v846 = vld [vmem:[%s836 + $0x48] sm:$0xff]
        %v847 = vld [vmem:[%s836 + $0x50] sm:$0xff]
        %v848 = vld [vmem:[%s836 + $0x58] sm:$0xff]
        %v849 = vld [vmem:[%s836 + $0x60] sm:$0xff]
        %v850 = vld [vmem:[%s836 + $0x68] sm:$0xff]
        %v851 = vld [vmem:[%s836 + $0x70] sm:$0xff]
        %v852 = vld [vmem:[%s836 + $0x78] sm:$0xff]
        %v853 = vld [vmem:[%s836 + $0x80] sm:$0xff]
        %v854 = vld [vmem:[%s836 + $0x88] sm:$0xff]
        %vm859 = vcmask 1045504
        %v860 = vrot.slane %v832, 2
        %v861 = vrot.slane %v611, 2
        %v862 = vsel %vm859, %v860, %v861
        %v863 = vrot.slane %v833, 2
        %v864 = vrot.slane %v612, 2
        %v865 = vsel %vm859, %v863, %v864
        %v866 = vrot.slane %v834, 2
        %v867 = vsel %vm859, %v861, %v866
        %v868 = vrot.slane %v835, 2
        %v869 = vsel %vm859, %v864, %v868
        %v872 = vsel %vm575, %v865, 0
        %v874 = vsel %vm575, %v869, 0
        %876 = vmatprep.subr.mxu0 0.0
        %877 = vmatpush1.msra.mxu0 %v837
        %878 = vmatprep.subr.mxu0 0.0
        %879 = vmatpush1.msra.mxu0 %v838
        %880 = vmatprep.subr.mxu0 0.0
        %881 = vmatpush1.msra.mxu0 %v839
        %882 = vmatprep.subr.mxu0 0.0
        %883 = vmatpush1.msra.mxu0 %v840
        %884 = vmatprep.subr.mxu0 0.0
        %885 = vmatpush1.msra.mxu0 %v841
        %886 = vmatprep.subr.mxu0 0.0
        %887 = vmatpush1.msra.mxu0 %v842
        %888 = vmatprep.subr.mxu0 0.0
        %889 = vmatpush1.msra.mxu0 %v843
        %890 = vmatprep.subr.mxu0 0.0
        %891 = vmatpush1.msra.mxu0 %v844
        %892 = vmatprep.subr.mxu0 0.0
        %893 = vmatpush1.msra.mxu0 %v845
        %894 = vmatprep.subr.mxu0 0.0
        %895 = vmatpush1.msra.mxu0 %v846
        %896 = vmatprep.subr.mxu0 0.0
        %897 = vmatpush1.msra.mxu0 %v847
        %898 = vmatprep.subr.mxu0 0.0
        %899 = vmatpush1.msra.mxu0 %v848
        %900 = vmatprep.subr.mxu0 0.0
        %901 = vmatpush1.msra.mxu0 %v849
        %902 = vmatprep.subr.mxu0 0.0
        %903 = vmatpush1.msra.mxu0 %v850
        %904 = vmatprep.subr.mxu0 0.0
        %905 = vmatpush1.msra.mxu0 %v851
        %906 = vmatprep.subr.mxu0 0.0
        %907 = vmatpush1.msra.mxu0 %v852
        %908 = vmatprep.subr.mxu0 0.0
        %909 = vmatpush1.msra.mxu0 %v853
        %910 = vmatprep.subr.mxu0 0.0
        %911 = vmatpush1.msra.mxu0 %v854
        %912 = vmatprep.subr.mxu0 0.0
        %913 = vmatpush1.msra.mxu0 0.0
        %914 = vmatprep.subr.mxu0 0.0
        %915 = vmatpush1.msra.mxu0 0.0
        %916 = vmatprep.subr.mxu0 0.0
        %917 = vmatpush1.msra.mxu0 0.0
        %918 = vmatprep.subr.mxu0 0.0
        %919 = vmatpush1.msra.mxu0 0.0
        %920 = vmatprep.subr.mxu0 0.0
        %921 = vmatpush1.msra.mxu0 0.0
        %922 = vmatprep.subr.mxu0 0.0
        %923 = vmatpush1.msra.mxu0 0.0
        %924 = vmatprep.subr.mxu0 0.0
        %925 = vmatpush1.msra.mxu0 0.0
        %926 = vmatprep.subr.mxu0 0.0
        %927 = vmatpush1.msra.mxu0 0.0
        %928 = vmatprep.subr.mxu0 0.0
        %929 = vmatpush1.msra.mxu0 0.0
        %930 = vmatprep.subr.mxu0 0.0
        %931 = vmatpush1.msra.mxu0 0.0
        %932 = vmatprep.subr.mxu0 0.0
        %933 = vmatpush1.msra.mxu0 0.0
        %934 = vmatprep.subr.mxu0 0.0
        %935 = vmatpush1.msra.mxu0 0.0
        %936 = vmatprep.subr.mxu0 0.0
        %937 = vmatpush1.msra.mxu0 0.0
        %938 = vmatprep.subr.mxu0 0.0
        %939 = vmatpush1.msra.mxu0 0.0
        %940 = vmatprep.mubr.f32.mxu0 %v872
        %941 = vmatmul.mubr.f32.gmra.mrb[0].mxu0 %v862
        %v942 = vpop.f32.mrb[0].mxu0
        %v943 = vadd.f32 0.0, %v942
        %v944 = vpop.f32.mrb[0].mxu0
        %945 = vmatprep.mubr.f32.mxu0 %v874
        %946 = vmatmul.mubr.f32.gmra.mrb[0].mxu0 %v867
        %v947 = vpop.f32.mrb[0].mxu0
        %v948 = vadd.f32 0.0, %v947
        %v949 = vpop.f32.mrb[0].mxu0
        %950 = vdwg.mxu0
        %v951 = vadd.f32 %v824, %v943
        %v952 = vadd.f32 %v829, %v948
        %v953 = vld [vmem:[%s4] sm:$0x1]
        %v955 = vlaneseq
        %v956 = vshrl.u32 %v955, 7
        %v957 = vsub.s32 0, %v956
        %v958 = vrot.slane %v953, %v957
        %v960 = vadd.f32 %v951, %v958
        %v961 = vadd.f32 %v952, %v958
        %v962 = vmax.f32 %v960, 0.0
        %v963 = vmax.f32 %v961, 0.0
        %v966 = vcombine.high %v962, %v962
        %v968 = vunpack.c.l.s4 1983009808
        %v969 = vunpack.c.0.s8 %v968
        %v970 = vlaneseq
        %v971 = vshrl.u32 %v970, 7
        %v972 = vsub.s32 %v969, %v971
        %v973 = vrot.slane %v962, %v972
        %v975 = vunpack.c.l.s4 1983009808
        %v976 = vunpack.c.0.s8 %v975
        %v977 = vlaneseq
        %v978 = vshrl.u32 %v977, 7
        %v979 = vsub.s32 %v976, %v978
        %v980 = vrot.slane %v966, %v979
        %v981 = vcombine.high %v973, %v973
        %v982 = vcombine.high %v980, %v980
        %v983 = vcombine.high %v963, %v963
        %v985 = vunpack.c.l.s4 1983009808
        %v986 = vunpack.c.0.s8 %v985
        %v987 = vlaneseq
        %v988 = vshrl.u32 %v987, 7
        %v989 = vsub.s32 %v986, %v988
        %v990 = vrot.slane %v963, %v989
        %v992 = vunpack.c.l.s4 1983009808
        %v993 = vunpack.c.0.s8 %v992
        %v994 = vlaneseq
        %v995 = vshrl.u32 %v994, 7
        %v996 = vsub.s32 %v993, %v995
        %v997 = vrot.slane %v983, %v996
        %v998 = vcombine.high %v990, %v990
        %v999 = vcombine.high %v997, %v997
        %v1008 = vrot.slane %v973, 7
        %v1009 = vrot.slane %v1008, 2
        %v1010 = vrot.slane %v981, 7
        %v1011 = vrot.slane %v1010, 2
        %v1012 = vrot.slane %v980, 7
        %v1013 = vrot.slane %v1012, 2
        %v1014 = vrot.slane %v982, 7
        %v1015 = vrot.slane %v1014, 2
        %v1016 = vrot.slane %v990, 7
        %v1017 = vrot.slane %v1016, 2
        %v1018 = vrot.slane %v998, 7
        %v1019 = vrot.slane %v1018, 2
        %v1020 = vrot.slane %v997, 7
        %v1021 = vrot.slane %v1020, 2
        %v1022 = vrot.slane %v999, 7
        %v1023 = vrot.slane %v1022, 2
        %v1032 = vmax.f32 %v973, %v1009
        %v1033 = vmax.f32 %v981, %v1011
        %v1034 = vmax.f32 %v980, %v1013
        %v1035 = vmax.f32 %v982, %v1015
        %v1036 = vmax.f32 %v990, %v1017
        %v1037 = vmax.f32 %v998, %v1019
        %v1038 = vmax.f32 %v997, %v1021
        %v1039 = vmax.f32 %v999, %v1023
        %v1040 = vld [vmem:[%s5] sm:$0xff]
        %v1041 = vld [vmem:[%s5 + $0x8] sm:$0xff]
        %v1042 = vld [vmem:[%s5 + $0x10] sm:$0xff]
        %v1043 = vld [vmem:[%s5 + $0x18] sm:$0xff]
        %v1044 = vld [vmem:[%s5 + $0x20] sm:$0xff]
        %v1045 = vld [vmem:[%s5 + $0x28] sm:$0xff]
        %v1046 = vld [vmem:[%s5 + $0x30] sm:$0xff]
        %v1047 = vld [vmem:[%s5 + $0x38] sm:$0xff]
        %v1048 = vld [vmem:[%s5 + $0x40] sm:$0xff]
        %v1049 = vld [vmem:[%s5 + $0x48] sm:$0xff]
        %v1050 = vld [vmem:[%s5 + $0x50] sm:$0xff]
        %v1051 = vld [vmem:[%s5 + $0x58] sm:$0xff]
        %v1052 = vld [vmem:[%s5 + $0x60] sm:$0xff]
        %v1053 = vld [vmem:[%s5 + $0x68] sm:$0xff]
        %v1054 = vld [vmem:[%s5 + $0x70] sm:$0xff]
        %v1055 = vld [vmem:[%s5 + $0x78] sm:$0xff]
        %v1064 = vlaneseq
        %v1065 = vshrl.u32 %v1064, 7
        %v1066 = vsub.s32 0, %v1065
        %v1067 = vrot.slane %v1032, %v1066
        %v1068 = vlaneseq
        %v1069 = vshrl.u32 %v1068, 7
        %v1070 = vsub.s32 0, %v1069
        %v1071 = vrot.slane %v1033, %v1070
        %v1072 = vlaneseq
        %v1073 = vshrl.u32 %v1072, 7
        %v1074 = vsub.s32 0, %v1073
        %v1075 = vrot.slane %v1034, %v1074
        %v1076 = vlaneseq
        %v1077 = vshrl.u32 %v1076, 7
        %v1078 = vsub.s32 0, %v1077
        %v1079 = vrot.slane %v1035, %v1078
        %v1080 = vlaneseq
        %v1081 = vshrl.u32 %v1080, 7
        %v1082 = vsub.s32 0, %v1081
        %v1083 = vrot.slane %v1036, %v1082
        %v1084 = vlaneseq
        %v1085 = vshrl.u32 %v1084, 7
        %v1086 = vsub.s32 0, %v1085
        %v1087 = vrot.slane %v1037, %v1086
        %v1088 = vlaneseq
        %v1089 = vshrl.u32 %v1088, 7
        %v1090 = vsub.s32 0, %v1089
        %v1091 = vrot.slane %v1038, %v1090
        %v1092 = vlaneseq
        %v1093 = vshrl.u32 %v1092, 7
        %v1094 = vsub.s32 0, %v1093
        %v1095 = vrot.slane %v1039, %v1094
        %vm1096 = vcmask 1041409
        %v1097 = vsel %vm1096, %v1071, %v1067
        %vm1098 = vcmask 1042434
        %v1099 = vsel %vm1098, %v1075, %v1097
        %vm1100 = vcmask 1043459
        %v1101 = vsel %vm1100, %v1079, %v1099
        %vm1102 = vcmask 1044484
        %v1103 = vsel %vm1102, %v1083, %v1101
        %vm1104 = vcmask 1045509
        %v1105 = vsel %vm1104, %v1087, %v1103
        %vm1106 = vcmask 1046534
        %v1107 = vsel %vm1106, %v1091, %v1105
        %vm1108 = vcmask 1047559
        %v1109 = vsel %vm1108, %v1095, %v1107
        %1111 = vmatprep.subr.mxu0 0.0
        %1112 = vmatpush1.msra.mxu0 %v1040
        %1113 = vmatprep.subr.mxu0 0.0
        %1114 = vmatpush1.msra.mxu0 %v1041
        %1115 = vmatprep.subr.mxu0 0.0
        %1116 = vmatpush1.msra.mxu0 %v1042
        %1117 = vmatprep.subr.mxu0 0.0
        %1118 = vmatpush1.msra.mxu0 %v1043
        %1119 = vmatprep.subr.mxu0 0.0
        %1120 = vmatpush1.msra.mxu0 %v1044
        %1121 = vmatprep.subr.mxu0 0.0
        %1122 = vmatpush1.msra.mxu0 %v1045
        %1123 = vmatprep.subr.mxu0 0.0
        %1124 = vmatpush1.msra.mxu0 %v1046
        %1125 = vmatprep.subr.mxu0 0.0
        %1126 = vmatpush1.msra.mxu0 %v1047
        %1127 = vmatprep.subr.mxu0 0.0
        %1128 = vmatpush1.msra.mxu0 %v1048
        %1129 = vmatprep.subr.mxu0 0.0
        %1130 = vmatpush1.msra.mxu0 %v1049
        %1131 = vmatprep.subr.mxu0 0.0
        %1132 = vmatpush1.msra.mxu0 %v1050
        %1133 = vmatprep.subr.mxu0 0.0
        %1134 = vmatpush1.msra.mxu0 %v1051
        %1135 = vmatprep.subr.mxu0 0.0
        %1136 = vmatpush1.msra.mxu0 %v1052
        %1137 = vmatprep.subr.mxu0 0.0
        %1138 = vmatpush1.msra.mxu0 %v1053
        %1139 = vmatprep.subr.mxu0 0.0
        %1140 = vmatpush1.msra.mxu0 %v1054
        %1141 = vmatprep.subr.mxu0 0.0
        %1142 = vmatpush1.msra.mxu0 %v1055
        %1143 = vmatprep.subr.mxu0 0.0
        %1144 = vmatpush1.msra.mxu0 0.0
        %1145 = vmatprep.subr.mxu0 0.0
        %1146 = vmatpush1.msra.mxu0 0.0
        %1147 = vmatprep.subr.mxu0 0.0
        %1148 = vmatpush1.msra.mxu0 0.0
        %1149 = vmatprep.subr.mxu0 0.0
        %1150 = vmatpush1.msra.mxu0 0.0
        %1151 = vmatprep.subr.mxu0 0.0
        %1152 = vmatpush1.msra.mxu0 0.0
        %1153 = vmatprep.subr.mxu0 0.0
        %1154 = vmatpush1.msra.mxu0 0.0
        %1155 = vmatprep.subr.mxu0 0.0
        %1156 = vmatpush1.msra.mxu0 0.0
        %1157 = vmatprep.subr.mxu0 0.0
        %1158 = vmatpush1.msra.mxu0 0.0
        %1159 = vmatprep.subr.mxu0 0.0
        %1160 = vmatpush1.msra.mxu0 0.0
        %1161 = vmatprep.subr.mxu0 0.0
        %1162 = vmatpush1.msra.mxu0 0.0
        %1163 = vmatprep.subr.mxu0 0.0
        %1164 = vmatpush1.msra.mxu0 0.0
        %1165 = vmatprep.subr.mxu0 0.0
        %1166 = vmatpush1.msra.mxu0 0.0
        %1167 = vmatprep.subr.mxu0 0.0
        %1168 = vmatpush1.msra.mxu0 0.0
        %1169 = vmatprep.subr.mxu0 0.0
        %1170 = vmatpush1.msra.mxu0 0.0
        %1171 = vmatprep.subr.mxu0 0.0
        %1172 = vmatpush1.msra.mxu0 0.0
        %1173 = vmatprep.subr.mxu0 0.0
        %1174 = vmatpush1.msra.mxu0 0.0
        %1175 = vmatprep.mubr.f32.mxu0 0.0
        %1176 = vmatmul.mubr.f32.gmra.mrb[0].mxu0 %v1109
        %v1177 = vpop.f32.mrb[0].mxu0
        %v1178 = vadd.f32 0.0, %v1177
        %v1179 = vpop.f32.mrb[0].mxu0
        %1180 = vdwg.mxu0
        %s1181 = scalar_lea.vmem %s5, 128
        %v1182 = vld [vmem:[%s1181] sm:$0xff]
        %v1183 = vld [vmem:[%s1181 + $0x8] sm:$0xff]
        %v1184 = vld [vmem:[%s1181 + $0x10] sm:$0xff]
        %v1185 = vld [vmem:[%s1181 + $0x18] sm:$0xff]
        %v1186 = vld [vmem:[%s1181 + $0x20] sm:$0xff]
        %v1187 = vld [vmem:[%s1181 + $0x28] sm:$0xff]
        %v1188 = vld [vmem:[%s1181 + $0x30] sm:$0xff]
        %v1189 = vld [vmem:[%s1181 + $0x38] sm:$0xff]
        %v1190 = vld [vmem:[%s1181 + $0x40] sm:$0xff]
        %v1191 = vld [vmem:[%s1181 + $0x48] sm:$0xff]
        %v1192 = vld [vmem:[%s1181 + $0x50] sm:$0xff]
        %v1193 = vld [vmem:[%s1181 + $0x58] sm:$0xff]
        %v1194 = vld [vmem:[%s1181 + $0x60] sm:$0xff]
        %v1195 = vld [vmem:[%s1181 + $0x68] sm:$0xff]
        %v1196 = vld [vmem:[%s1181 + $0x70] sm:$0xff]
        %v1197 = vld [vmem:[%s1181 + $0x78] sm:$0xff]
        %1198 = vmatprep.subr.mxu0 0.0
        %1199 = vmatpush1.msra.mxu0 %v1182
        %1200 = vmatprep.subr.mxu0 0.0
        %1201 = vmatpush1.msra.mxu0 %v1183
        %1202 = vmatprep.subr.mxu0 0.0
        %1203 = vmatpush1.msra.mxu0 %v1184
        %1204 = vmatprep.subr.mxu0 0.0
        %1205 = vmatpush1.msra.mxu0 %v1185
        %1206 = vmatprep.subr.mxu0 0.0
        %1207 = vmatpush1.msra.mxu0 %v1186
        %1208 = vmatprep.subr.mxu0 0.0
        %1209 = vmatpush1.msra.mxu0 %v1187
        %1210 = vmatprep.subr.mxu0 0.0
        %1211 = vmatpush1.msra.mxu0 %v1188
        %1212 = vmatprep.subr.mxu0 0.0
        %1213 = vmatpush1.msra.mxu0 %v1189
        %1214 = vmatprep.subr.mxu0 0.0
        %1215 = vmatpush1.msra.mxu0 %v1190
        %1216 = vmatprep.subr.mxu0 0.0
        %1217 = vmatpush1.msra.mxu0 %v1191
        %1218 = vmatprep.subr.mxu0 0.0
        %1219 = vmatpush1.msra.mxu0 %v1192
        %1220 = vmatprep.subr.mxu0 0.0
        %1221 = vmatpush1.msra.mxu0 %v1193
        %1222 = vmatprep.subr.mxu0 0.0
        %1223 = vmatpush1.msra.mxu0 %v1194
        %1224 = vmatprep.subr.mxu0 0.0
        %1225 = vmatpush1.msra.mxu0 %v1195
        %1226 = vmatprep.subr.mxu0 0.0
        %1227 = vmatpush1.msra.mxu0 %v1196
        %1228 = vmatprep.subr.mxu0 0.0
        %1229 = vmatpush1.msra.mxu0 %v1197
        %1230 = vmatprep.subr.mxu0 0.0
        %1231 = vmatpush1.msra.mxu0 0.0
        %1232 = vmatprep.subr.mxu0 0.0
        %1233 = vmatpush1.msra.mxu0 0.0
        %1234 = vmatprep.subr.mxu0 0.0
        %1235 = vmatpush1.msra.mxu0 0.0
        %1236 = vmatprep.subr.mxu0 0.0
        %1237 = vmatpush1.msra.mxu0 0.0
        %1238 = vmatprep.subr.mxu0 0.0
        %1239 = vmatpush1.msra.mxu0 0.0
        %1240 = vmatprep.subr.mxu0 0.0
        %1241 = vmatpush1.msra.mxu0 0.0
        %1242 = vmatprep.subr.mxu0 0.0
        %1243 = vmatpush1.msra.mxu0 0.0
        %1244 = vmatprep.subr.mxu0 0.0
        %1245 = vmatpush1.msra.mxu0 0.0
        %1246 = vmatprep.subr.mxu0 0.0
        %1247 = vmatpush1.msra.mxu0 0.0
        %1248 = vmatprep.subr.mxu0 0.0
        %1249 = vmatpush1.msra.mxu0 0.0
        %1250 = vmatprep.subr.mxu0 0.0
        %1251 = vmatpush1.msra.mxu0 0.0
        %1252 = vmatprep.subr.mxu0 0.0
        %1253 = vmatpush1.msra.mxu0 0.0
        %1254 = vmatprep.subr.mxu0 0.0
        %1255 = vmatpush1.msra.mxu0 0.0
        %1256 = vmatprep.subr.mxu0 0.0
        %1257 = vmatpush1.msra.mxu0 0.0
        %1258 = vmatprep.subr.mxu0 0.0
        %1259 = vmatpush1.msra.mxu0 0.0
        %1260 = vmatprep.subr.mxu0 0.0
        %1261 = vmatpush1.msra.mxu0 0.0
        %1262 = vmatprep.mubr.f32.mxu0 0.0
        %1263 = vmatmul.mubr.f32.gmra.mrb[0].mxu0 %v1109
        %v1264 = vpop.f32.mrb[0].mxu0
        %v1265 = vadd.f32 0.0, %v1264
        %v1266 = vpop.f32.mrb[0].mxu0
        %1267 = vdwg.mxu0
        %v1268 = vmax.f32 %v1178, %v1265
        %vm1269 = vcmask 523264
        %1270 = vst.msk [vmem:[%s259] sm:$0xff] %vm1269, %v1268
        %s1271 = sand.u32 %s160, 1
        %s1272 = scalar_lea.sflag [#allocation6], %s1271
        %s1273 = sand.u32 %s160, 1
        %s1274 = smul.addr %s1273, 8
        %s1275 = scalar_lea.vmem [#allocation7], %s1274
        // Predicated region
        $region49: #{tpu_custom_call.1} parent=43 // pred_check
          %p1276 = pneg %p170
        $region50: #{tpu_custom_call.1} parent=43 // pred_check_branch
          %1278 = sbr.rel (%p1276) target = $region52
        $region51: #{tpu_custom_call.1} parent=43 // pred_region
          %s1280 = ssub.s32 128, 128
          %1281 = vsyncadd %s1272, %s1280
          %s1282 = smul.addr %s21, 128
          %s1283 = scalar_lea.hbm %s6, %s1282
          %s1285 = sshll.u32 %s1275, 4
          %s1286 = int_to_ptr.vmem [resolvable:$true] %s1285
          %1288 = dma.vmem_to_hbm [thread:$0]  %s1286, 128, %s1283, %s1272
        $region52: #{tpu_custom_call.1} parent=43 // pred_fallthru
          _
      $region44: #{tpu_custom_call.1} parent=5 // pred_fallthru
        _
      %p1289 = scmp.le.s32.totalorder 2, %s16
      // Predicated region
      $region53: #{tpu_custom_call.1} parent=5 // pred_check
        %p1290 = pneg %p1289
      $region54: #{tpu_custom_call.1} parent=5 // pred_check_branch
        %1292 = sbr.rel (%p1290) target = $region56
      $region55: #{tpu_custom_call.1} parent=5 // pred_region
        %s1293 = ssub.s32 %s16, 2
        // Predicated region
        $region57: #{tpu_custom_call.1} parent=55 // pred_check
          %p1294 = pneg %p176
        $region58: #{tpu_custom_call.1} parent=55 // pred_check_branch
          %1296 = sbr.rel (%p1294) target = $region60
        $region59: #{tpu_custom_call.1} parent=55 // pred_region
          %s1297 = sand.u32 %s161, 1
          %s1298 = scalar_lea.sflag [#allocation6], %s1297
          %s1299 = sand.u32 %s161, 1
          %s1300 = smul.addr %s1299, 8
          %s1301 = scalar_lea.vmem [#allocation7], %s1300
          %1302 = dma.done %s1298, 128
        $region60: #{tpu_custom_call.1} parent=55 // pred_fallthru
          _
      $region56: #{tpu_custom_call.1} parent=5 // pred_fallthru
        _
    $region6: #{tpu_custom_call.1} parent=1 // loop_footer
      %s20 = sadd.s32 1, %s16
    $region7: #{tpu_custom_call.1} parent=1 // loop_footer_branch
      %15 = sbr.rel target = $region3
    $region8: #{tpu_custom_call.1} parent=1 // loop_exit
      _
    %1303 = vsyncpa [#allocation5], 1
    %s1304 = scalar_lea.sflag [#allocation5], 1
    %1305 = vsyncpa %s1304, 1
    %1306 = vsyncpa [#allocation6], 1
    %s1307 = scalar_lea.sflag [#allocation6], 1
    %1308 = vsyncpa %s1307, 1

</llo_original>
